<compile_context>
chip_gen: v6e
topology: v6e:2x2x1
jax: 0.10.0
libtpu: 0.0.40
codegen_flags: <defaults>
</compile_context>

<pallas_src>
import jax
import jax.numpy as jnp
import numpy as np
from jax.experimental import pallas as pl
from jax.experimental.pallas import tpu as pltpu

EPS = 1e-5
HI = jax.lax.Precision.HIGHEST   # reference path only


# ----------------------------------------------------------------------------
# Fused kernel: whole CNN for one batch element.  Activation layout: (L, C).
# ----------------------------------------------------------------------------
def _cnn_kernel(xcol_ref, w1_ref, b1_ref, w2_ref, b2_ref, w3_ref, b3_ref,
                w4_ref, b4_ref, w5_ref, b5_ref, out_ref,
                zbuf1, zbuf2, zbuf3, pad2, pad3, pad4):

    def maxpool2(z, zbuf):
        # Exact MaxPool1d(kernel=2, stride=2) over the row (length) axis:
        # stash in VMEM scratch, read even/odd rows via sublane-strided loads,
        # max on the VPU.  Keeps the MXU free and needs no precision tricks.
        zbuf[...] = z
        half = z.shape[0] // 2
        even = zbuf[pl.ds(0, half, stride=2), :]
        odd = zbuf[pl.ds(1, half, stride=2), :]
        return jnp.maximum(even, odd)

    def conv7(x, pad_ref, w_ref, b_ref):
        # Conv1d(kernel=7, stride=1, padding=3) + folded-BN bias + ReLU as a
        # single GEMM: (L, 7*Cin) im2col patch @ (7*Cin, Cout) weight.
        lin, cin = x.shape
        k = w_ref.shape[0] // cin                  # = 7
        halo = (k - 1) // 2
        pad_ref[...] = jnp.zeros_like(pad_ref)     # zero-padded copy of x
        pad_ref[halo:halo + lin, :] = x
        patch = jnp.concatenate([pad_ref[s:s + lin, :] for s in range(k)],
                                axis=1)            # (lin, k*cin)
        y = jnp.dot(patch.astype(jnp.bfloat16), w_ref[...],
                    preferred_element_type=jnp.float32)
        return jnp.maximum(y + b_ref[...], 0.0)

    # Layer 1: stride-128 / kernel-63 conv == one GEMM on pre-windowed input,
    # + folded-BN bias + ReLU + MaxPool(2).
    h = jnp.dot(xcol_ref[0], w1_ref[...], preferred_element_type=jnp.float32)
    h = jnp.maximum(h + b1_ref[...], 0.0)
    h = maxpool2(h, zbuf1)                                    # (L1/2, 32)

    # Layers 2-4: Conv1d(7, pad 3) + BN + ReLU (+ pool for layers 2 and 3).
    h = maxpool2(conv7(h, pad2, w2_ref, b2_ref), zbuf2)       # (L1/4, 64)
    h = maxpool2(conv7(h, pad3, w3_ref, b3_ref), zbuf3)       # (L1/8, 128)
    h = conv7(h, pad4, w4_ref, b4_ref)                        # (L1/8, 256)

    # 1x1 classifier fused in as a final (L1/8, 256) @ (256, ncls) GEMM.
    logits = jnp.dot(h.astype(jnp.bfloat16), w5_ref[...],
                     preferred_element_type=jnp.float32) + b5_ref[...]
    out_ref[0] = logits


# ----------------------------------------------------------------------------
# Host wrapper: fold BN, reshape weights, window layer-1 input, one pallas_call.
# ----------------------------------------------------------------------------
def _fold_bn(w, b, bn):
    gamma, beta, mean, var = bn
    s = gamma * jax.lax.rsqrt(var + EPS)
    return w * s[:, None, None], (b - mean) * s + beta


def cnn_forward(x, p):
    """x: (B, 1, L) float32 with L % 1024 == 0 -> (B, num_classes, L // 1024)."""
    B, cin, L = x.shape
    assert cin == 1 and L % 1024 == 0
    L1 = L // 128                     # length after the stride-128 conv
    Lf = L1 // 8                      # final feature length
    ncls = p["w5"].shape[0]

    # ---- host-side prep (tiny): fold BN, flatten weights, window the input --
    w1, b1 = _fold_bn(p["w1"], p["b1"], p["bn1"])     # (32, 1, 63)
    w2, b2 = _fold_bn(p["w2"], p["b2"], p["bn2"])     # (64, 32, 7)
    w3, b3 = _fold_bn(p["w3"], p["b3"], p["bn3"])     # (128, 64, 7)
    w4, b4 = _fold_bn(p["w4"], p["b4"], p["bn4"])     # (256, 128, 7)
    w5, b5 = p["w5"], p["b5"]                         # (ncls, 256, 1)

    # Layer-1 im2col: stride (128) > kernel (63), windows don't overlap, so it
    # is just pad + reshape; weight columns 63..127 are zero-padded.
    xp = jnp.pad(x[:, 0, :], ((0, 0), (31, 31)))
    xcol = xp[:, :128 * L1].reshape(B, L1, 128).astype(jnp.bfloat16)
    w1p = jnp.zeros((128, 32), jnp.float32).at[:63, :].set(w1[:, 0, :].T)

    def flat7(w):  # (Cout, Cin, 7) -> (7*Cin, Cout), row index = k*Cin + ci
        return jnp.transpose(w, (2, 1, 0)).reshape(-1, w.shape[0])

    bf = lambda a: a.astype(jnp.bfloat16)
    row = lambda v: v.reshape(1, -1).astype(jnp.float32)
    ops = (xcol,
           bf(w1p), row(b1),
           bf(flat7(w2)), row(b2),
           bf(flat7(w3)), row(b3),
           bf(flat7(w4)), row(b4),
           bf(w5[:, :, 0].T), row(b5))

    in_specs = [pl.BlockSpec((1, L1, 128), lambda i: (i, 0, 0))]
    in_specs += [pl.BlockSpec(a.shape, lambda i: (0, 0)) for a in ops[1:]]

    out_lc = pl.pallas_call(
        _cnn_kernel,
        out_shape=jax.ShapeDtypeStruct((B, Lf, ncls), jnp.float32),
        grid_spec=pltpu.PrefetchScalarGridSpec(
            num_scalar_prefetch=0,
            grid=(B,),
            in_specs=in_specs,
            out_specs=pl.BlockSpec((1, Lf, ncls), lambda i: (i, 0, 0)),
            scratch_shapes=[
                pltpu.VMEM((L1, 32), jnp.float32),            # pre-pool, layer 1
                pltpu.VMEM((L1 // 2, 64), jnp.float32),       # pre-pool, layer 2
                pltpu.VMEM((L1 // 4, 128), jnp.float32),      # pre-pool, layer 3
                pltpu.VMEM((L1 // 2 + 6, 32), jnp.float32),   # padded in, layer 2
                pltpu.VMEM((L1 // 4 + 6, 64), jnp.float32),   # padded in, layer 3
                pltpu.VMEM((L1 // 8 + 6, 128), jnp.float32),  # padded in, layer 4
            ],
        ),
        compiler_params=pltpu.CompilerParams(dimension_semantics=("parallel",)),
    )(*ops)

    # Kernel emits (B, L, C); PyTorch layout is (B, C, L).
    return jnp.transpose(out_lc, (0, 2, 1))


# ----------------------------------------------------------------------------
# Pure-JAX reference (f32, HIGHEST precision, eval-mode BatchNorm)
# ----------------------------------------------------------------------------
def _ref_conv1d(x, w, b, stride, padding):
    out = jax.lax.conv_general_dilated(
        x, w, window_strides=(stride,), padding=[(padding, padding)],
        dimension_numbers=("NCH", "OIH", "NCH"), precision=HI)
    return out + b[None, :, None]


def _ref_bn(x, g, be, mu, var):
    inv = jax.lax.rsqrt(var + EPS)
    return (x - mu[None, :, None]) * (g * inv)[None, :, None] + be[None, :, None]


def _ref_pool(x):
    B, C, L = x.shape
    return jnp.max(x.reshape(B, C, L // 2, 2), axis=-1)


def reference_forward(x, p):
    h = _ref_conv1d(x, p["w1"], p["b1"], 128, 31)
    h = _ref_pool(jnp.maximum(_ref_bn(h, *p["bn1"]), 0.0))
    h = _ref_conv1d(h, p["w2"], p["b2"], 1, 3)
    h = _ref_pool(jnp.maximum(_ref_bn(h, *p["bn2"]), 0.0))
    h = _ref_conv1d(h, p["w3"], p["b3"], 1, 3)
    h = _ref_pool(jnp.maximum(_ref_bn(h, *p["bn3"]), 0.0))
    h = _ref_conv1d(h, p["w4"], p["b4"], 1, 3)
    h = jnp.maximum(_ref_bn(h, *p["bn4"]), 0.0)
    h = _ref_conv1d(h, p["w5"], p["b5"], 1, 0)
    return h


# ----------------------------------------------------------------------------
# Deterministic parameter init (shapes from the PyTorch module's __init__)
# ----------------------------------------------------------------------------
def init_params(key):
    def conv_init(k, cout, cin, ksize):
        fan_in = cin * ksize
        bound = 1.0 / np.sqrt(fan_in)
        kw, kb = jax.random.split(k)
        w = jax.random.uniform(kw, (cout, cin, ksize), jnp.float32, -bound, bound)
        b = jax.random.uniform(kb, (cout,), jnp.float32, -bound, bound)
        return w, b

    def bn_init(k, c):
        k1, k2, k3, k4 = jax.random.split(k, 4)
        gamma = 1.0 + 0.1 * jax.random.normal(k1, (c,), jnp.float32)
        beta = 0.1 * jax.random.normal(k2, (c,), jnp.float32)
        mean = 0.1 * jax.random.normal(k3, (c,), jnp.float32)
        var = 1.0 + 0.2 * jax.random.uniform(k4, (c,), jnp.float32)
        return (gamma, beta, mean, var)

    ks = jax.random.split(key, 9)
    w1, b1 = conv_init(ks[0], 32, 1, 63)
    w2, b2 = conv_init(ks[2], 64, 32, 7)
    w3, b3 = conv_init(ks[4], 128, 64, 7)
    w4, b4 = conv_init(ks[6], 256, 128, 7)
    w5, b5 = conv_init(ks[8], 4, 256, 1)
    return dict(
        w1=w1, b1=b1, bn1=bn_init(ks[1], 32),
        w2=w2, b2=b2, bn2=bn_init(ks[3], 64),
        w3=w3, b3=b3, bn3=bn_init(ks[5], 128),
        w4=w4, b4=b4, bn4=bn_init(ks[7], 256),
        w5=w5, b5=b5,
    )


if __name__ == "__main__":
    B, L = 2, 8192  # small sequence_length; must be a multiple of 128*2*2*2 = 1024
    key = jax.random.PRNGKey(0)
    k_x, k_p = jax.random.split(key)
    x = jax.random.normal(k_x, (B, 1, L), jnp.float32)
    params = init_params(k_p)

    out = jax.block_until_ready(jax.jit(cnn_forward)(x, params))
    ref = jax.block_until_ready(reference_forward(x, params))

    assert out.shape == (B, 4, L // 1024), out.shape
    # Tolerance 1e-2 covers the bf16 matmul-input rounding (f32 accumulation);
    # any structural bug (windowing / pooling / BN folding) shows up as O(1).
    np.testing.assert_allclose(np.asarray(out), np.asarray(ref), rtol=1e-2, atol=1e-2)
    print("KERNEL_OK")
</pallas_src>

<mosaic_0001>
module attributes {stable_mosaic.version = 11 : i64} {
  func.func @_cnn_kernel(%arg0: i32, %arg1: memref<1x64x128xbf16, #tpu.memory_space<vmem>>, %arg2: memref<128x32xbf16, #tpu.memory_space<vmem>>, %arg3: memref<1x32xf32, #tpu.memory_space<vmem>>, %arg4: memref<224x64xbf16, #tpu.memory_space<vmem>>, %arg5: memref<1x64xf32, #tpu.memory_space<vmem>>, %arg6: memref<448x128xbf16, #tpu.memory_space<vmem>>, %arg7: memref<1x128xf32, #tpu.memory_space<vmem>>, %arg8: memref<896x256xbf16, #tpu.memory_space<vmem>>, %arg9: memref<1x256xf32, #tpu.memory_space<vmem>>, %arg10: memref<256x4xbf16, #tpu.memory_space<vmem>>, %arg11: memref<1x4xf32, #tpu.memory_space<vmem>>, %arg12: memref<1x8x4xf32, #tpu.memory_space<vmem>>, %arg13: memref<64x32xf32, #tpu.memory_space<vmem>>, %arg14: memref<32x64xf32, #tpu.memory_space<vmem>>, %arg15: memref<16x128xf32, #tpu.memory_space<vmem>>, %arg16: memref<38x32xf32, #tpu.memory_space<vmem>>, %arg17: memref<22x64xf32, #tpu.memory_space<vmem>>, %arg18: memref<14x128xf32, #tpu.memory_space<vmem>>) attributes {dimension_semantics = [#tpu.dimension_semantics<parallel>], iteration_bounds = array<i64: 2>, scalar_prefetch = 0 : i64, scratch_operands = 6 : i64, tpu.core_type = #tpu.core_type<tc>, window_params = [{transform_indices = @transform_0, window_bounds = array<i64: 1, 64, 128>}, {pipeline_mode = #tpu.pipeline_mode<synchronous>, transform_indices = @transform_1, window_bounds = array<i64: 128, 32>}, {pipeline_mode = #tpu.pipeline_mode<synchronous>, transform_indices = @transform_2, window_bounds = array<i64: 1, 32>}, {pipeline_mode = #tpu.pipeline_mode<synchronous>, transform_indices = @transform_3, window_bounds = array<i64: 224, 64>}, {pipeline_mode = #tpu.pipeline_mode<synchronous>, transform_indices = @transform_4, window_bounds = array<i64: 1, 64>}, {pipeline_mode = #tpu.pipeline_mode<synchronous>, transform_indices = @transform_5, window_bounds = array<i64: 448, 128>}, {pipeline_mode = #tpu.pipeline_mode<synchronous>, transform_indices = @transform_6, window_bounds = array<i64: 1, 128>}, {pipeline_mode = #tpu.pipeline_mode<synchronous>, transform_indices = @transform_7, window_bounds = array<i64: 896, 256>}, {pipeline_mode = #tpu.pipeline_mode<synchronous>, transform_indices = @transform_8, window_bounds = array<i64: 1, 256>}, {pipeline_mode = #tpu.pipeline_mode<synchronous>, transform_indices = @transform_9, window_bounds = array<i64: 256, 4>}, {pipeline_mode = #tpu.pipeline_mode<synchronous>, transform_indices = @transform_10, window_bounds = array<i64: 1, 4>}, {transform_indices = @transform_11, window_bounds = array<i64: 1, 8, 4>}]} {
    %c0 = arith.constant 0 : index
    %c0_0 = arith.constant 0 : index
    %c0_1 = arith.constant 0 : index
    %0 = vector.load %arg1[%c0, %c0_0, %c0_1] : memref<1x64x128xbf16, #tpu.memory_space<vmem>>, vector<1x64x128xbf16>
    %1 = vector.shape_cast %0 : vector<1x64x128xbf16> to vector<64x128xbf16>
    %c0_2 = arith.constant 0 : index
    %c0_3 = arith.constant 0 : index
    %2 = vector.load %arg2[%c0_2, %c0_3] : memref<128x32xbf16, #tpu.memory_space<vmem>>, vector<128x32xbf16>
    %cst = arith.constant dense<0.000000e+00> : vector<64x32xf32>
    %3 = tpu.matmul %1, %2, %cst {dimension_numbers = #tpu.dot_dimension_numbers<[1], [0], [0], [1], [0, 0, 1, 1], [], []>} : vector<64x128xbf16>, vector<128x32xbf16>, vector<64x32xf32> -> vector<64x32xf32>
    %c0_4 = arith.constant 0 : index
    %c0_5 = arith.constant 0 : index
    %4 = vector.load %arg3[%c0_4, %c0_5] : memref<1x32xf32, #tpu.memory_space<vmem>>, vector<1x32xf32>
    %5 = vector.broadcast %4 : vector<1x32xf32> to vector<64x32xf32>
    %6 = arith.addf %3, %5 : vector<64x32xf32>
    %cst_6 = arith.constant 0.000000e+00 : f32
    %7 = vector.broadcast %cst_6 : f32 to vector<64x32xf32>
    %8 = arith.maximumf %6, %7 : vector<64x32xf32>
    %c0_7 = arith.constant 0 : index
    %c0_8 = arith.constant 0 : index
    %9 = vector.load %arg13[%c0_7, %c0_8] : memref<64x32xf32, #tpu.memory_space<vmem>>, vector<64x32xf32>
    tpu.vector_store %arg13[%c0_7, %c0_8], %8 {strides = array<i32>} : memref<64x32xf32, #tpu.memory_space<vmem>>, vector<64x32xf32>,
    %c0_9 = arith.constant 0 : index
    %c0_10 = arith.constant 0 : index
    %10 = tpu.strided_load %arg13[%c0_9, %c0_10] {strides = array<i32: 2, 1>} : memref<64x32xf32, #tpu.memory_space<vmem>>, vector<32x32xf32>
    %c1 = arith.constant 1 : index
    %c0_11 = arith.constant 0 : index
    %11 = tpu.strided_load %arg13[%c1, %c0_11] {strides = array<i32: 2, 1>} : memref<64x32xf32, #tpu.memory_space<vmem>>, vector<32x32xf32>
    %12 = arith.maximumf %10, %11 : vector<32x32xf32>
    %cst_12 = arith.constant 0.000000e+00 : f32
    %13 = vector.broadcast %cst_12 : f32 to vector<38x32xf32>
    %c0_13 = arith.constant 0 : index
    %c0_14 = arith.constant 0 : index
    %14 = vector.load %arg16[%c0_13, %c0_14] : memref<38x32xf32, #tpu.memory_space<vmem>>, vector<38x32xf32>
    tpu.vector_store %arg16[%c0_13, %c0_14], %13 {strides = array<i32>} : memref<38x32xf32, #tpu.memory_space<vmem>>, vector<38x32xf32>,
    %c3 = arith.constant 3 : index
    %c0_15 = arith.constant 0 : index
    %15 = vector.load %arg16[%c3, %c0_15] : memref<38x32xf32, #tpu.memory_space<vmem>>, vector<32x32xf32>
    tpu.vector_store %arg16[%c3, %c0_15], %12 {strides = array<i32>} : memref<38x32xf32, #tpu.memory_space<vmem>>, vector<32x32xf32>,
    %c0_16 = arith.constant 0 : index
    %c0_17 = arith.constant 0 : index
    %16 = vector.load %arg16[%c0_16, %c0_17] : memref<38x32xf32, #tpu.memory_space<vmem>>, vector<32x32xf32>
    %c1_18 = arith.constant 1 : index
    %c0_19 = arith.constant 0 : index
    %17 = vector.load %arg16[%c1_18, %c0_19] : memref<38x32xf32, #tpu.memory_space<vmem>>, vector<32x32xf32>
    %c2 = arith.constant 2 : index
    %c0_20 = arith.constant 0 : index
    %18 = vector.load %arg16[%c2, %c0_20] : memref<38x32xf32, #tpu.memory_space<vmem>>, vector<32x32xf32>
    %c3_21 = arith.constant 3 : index
    %c0_22 = arith.constant 0 : index
    %19 = vector.load %arg16[%c3_21, %c0_22] : memref<38x32xf32, #tpu.memory_space<vmem>>, vector<32x32xf32>
    %c4 = arith.constant 4 : index
    %c0_23 = arith.constant 0 : index
    %20 = vector.load %arg16[%c4, %c0_23] : memref<38x32xf32, #tpu.memory_space<vmem>>, vector<32x32xf32>
    %c5 = arith.constant 5 : index
    %c0_24 = arith.constant 0 : index
    %21 = vector.load %arg16[%c5, %c0_24] : memref<38x32xf32, #tpu.memory_space<vmem>>, vector<32x32xf32>
    %c6 = arith.constant 6 : index
    %c0_25 = arith.constant 0 : index
    %22 = vector.load %arg16[%c6, %c0_25] : memref<38x32xf32, #tpu.memory_space<vmem>>, vector<32x32xf32>
    %23 = tpu.concatenate %16, %17, %18, %19, %20, %21, %22 in 1 : vector<32x32xf32>, vector<32x32xf32>, vector<32x32xf32>, vector<32x32xf32>, vector<32x32xf32>, vector<32x32xf32>, vector<32x32xf32> -> vector<32x224xf32>
    %24 = arith.truncf %23 : vector<32x224xf32> to vector<32x224xbf16>
    %c0_26 = arith.constant 0 : index
    %c0_27 = arith.constant 0 : index
    %25 = vector.load %arg4[%c0_26, %c0_27] : memref<224x64xbf16, #tpu.memory_space<vmem>>, vector<224x64xbf16>
    %cst_28 = arith.constant dense<0.000000e+00> : vector<32x64xf32>
    %26 = tpu.matmul %24, %25, %cst_28 {dimension_numbers = #tpu.dot_dimension_numbers<[1], [0], [0], [1], [0, 0, 1, 1], [], []>} : vector<32x224xbf16>, vector<224x64xbf16>, vector<32x64xf32> -> vector<32x64xf32>
    %c0_29 = arith.constant 0 : index
    %c0_30 = arith.constant 0 : index
    %27 = vector.load %arg5[%c0_29, %c0_30] : memref<1x64xf32, #tpu.memory_space<vmem>>, vector<1x64xf32>
    %28 = vector.broadcast %27 : vector<1x64xf32> to vector<32x64xf32>
    %29 = arith.addf %26, %28 : vector<32x64xf32>
    %cst_31 = arith.constant 0.000000e+00 : f32
    %30 = vector.broadcast %cst_31 : f32 to vector<32x64xf32>
    %31 = arith.maximumf %29, %30 : vector<32x64xf32>
    %c0_32 = arith.constant 0 : index
    %c0_33 = arith.constant 0 : index
    %32 = vector.load %arg14[%c0_32, %c0_33] : memref<32x64xf32, #tpu.memory_space<vmem>>, vector<32x64xf32>
    tpu.vector_store %arg14[%c0_32, %c0_33], %31 {strides = array<i32>} : memref<32x64xf32, #tpu.memory_space<vmem>>, vector<32x64xf32>,
    %c0_34 = arith.constant 0 : index
    %c0_35 = arith.constant 0 : index
    %33 = tpu.strided_load %arg14[%c0_34, %c0_35] {strides = array<i32: 2, 1>} : memref<32x64xf32, #tpu.memory_space<vmem>>, vector<16x64xf32>
    %c1_36 = arith.constant 1 : index
    %c0_37 = arith.constant 0 : index
    %34 = tpu.strided_load %arg14[%c1_36, %c0_37] {strides = array<i32: 2, 1>} : memref<32x64xf32, #tpu.memory_space<vmem>>, vector<16x64xf32>
    %35 = arith.maximumf %33, %34 : vector<16x64xf32>
    %cst_38 = arith.constant 0.000000e+00 : f32
    %36 = vector.broadcast %cst_38 : f32 to vector<22x64xf32>
    %c0_39 = arith.constant 0 : index
    %c0_40 = arith.constant 0 : index
    %37 = vector.load %arg17[%c0_39, %c0_40] : memref<22x64xf32, #tpu.memory_space<vmem>>, vector<22x64xf32>
    tpu.vector_store %arg17[%c0_39, %c0_40], %36 {strides = array<i32>} : memref<22x64xf32, #tpu.memory_space<vmem>>, vector<22x64xf32>,
    %c3_41 = arith.constant 3 : index
    %c0_42 = arith.constant 0 : index
    %38 = vector.load %arg17[%c3_41, %c0_42] : memref<22x64xf32, #tpu.memory_space<vmem>>, vector<16x64xf32>
    tpu.vector_store %arg17[%c3_41, %c0_42], %35 {strides = array<i32>} : memref<22x64xf32, #tpu.memory_space<vmem>>, vector<16x64xf32>,
    %c0_43 = arith.constant 0 : index
    %c0_44 = arith.constant 0 : index
    %39 = vector.load %arg17[%c0_43, %c0_44] : memref<22x64xf32, #tpu.memory_space<vmem>>, vector<16x64xf32>
    %c1_45 = arith.constant 1 : index
    %c0_46 = arith.constant 0 : index
    %40 = vector.load %arg17[%c1_45, %c0_46] : memref<22x64xf32, #tpu.memory_space<vmem>>, vector<16x64xf32>
    %c2_47 = arith.constant 2 : index
    %c0_48 = arith.constant 0 : index
    %41 = vector.load %arg17[%c2_47, %c0_48] : memref<22x64xf32, #tpu.memory_space<vmem>>, vector<16x64xf32>
    %c3_49 = arith.constant 3 : index
    %c0_50 = arith.constant 0 : index
    %42 = vector.load %arg17[%c3_49, %c0_50] : memref<22x64xf32, #tpu.memory_space<vmem>>, vector<16x64xf32>
    %c4_51 = arith.constant 4 : index
    %c0_52 = arith.constant 0 : index
    %43 = vector.load %arg17[%c4_51, %c0_52] : memref<22x64xf32, #tpu.memory_space<vmem>>, vector<16x64xf32>
    %c5_53 = arith.constant 5 : index
    %c0_54 = arith.constant 0 : index
    %44 = vector.load %arg17[%c5_53, %c0_54] : memref<22x64xf32, #tpu.memory_space<vmem>>, vector<16x64xf32>
    %c6_55 = arith.constant 6 : index
    %c0_56 = arith.constant 0 : index
    %45 = vector.load %arg17[%c6_55, %c0_56] : memref<22x64xf32, #tpu.memory_space<vmem>>, vector<16x64xf32>
    %46 = tpu.concatenate %39, %40, %41, %42, %43, %44, %45 in 1 : vector<16x64xf32>, vector<16x64xf32>, vector<16x64xf32>, vector<16x64xf32>, vector<16x64xf32>, vector<16x64xf32>, vector<16x64xf32> -> vector<16x448xf32>
    %47 = arith.truncf %46 : vector<16x448xf32> to vector<16x448xbf16>
    %c0_57 = arith.constant 0 : index
    %c0_58 = arith.constant 0 : index
    %48 = vector.load %arg6[%c0_57, %c0_58] : memref<448x128xbf16, #tpu.memory_space<vmem>>, vector<448x128xbf16>
    %cst_59 = arith.constant dense<0.000000e+00> : vector<16x128xf32>
    %49 = tpu.matmul %47, %48, %cst_59 {dimension_numbers = #tpu.dot_dimension_numbers<[1], [0], [0], [1], [0, 0, 1, 1], [], []>} : vector<16x448xbf16>, vector<448x128xbf16>, vector<16x128xf32> -> vector<16x128xf32>
    %c0_60 = arith.constant 0 : index
    %c0_61 = arith.constant 0 : index
    %50 = vector.load %arg7[%c0_60, %c0_61] : memref<1x128xf32, #tpu.memory_space<vmem>>, vector<1x128xf32>
    %51 = vector.broadcast %50 : vector<1x128xf32> to vector<16x128xf32>
    %52 = arith.addf %49, %51 : vector<16x128xf32>
    %cst_62 = arith.constant 0.000000e+00 : f32
    %53 = vector.broadcast %cst_62 : f32 to vector<16x128xf32>
    %54 = arith.maximumf %52, %53 : vector<16x128xf32>
    %c0_63 = arith.constant 0 : index
    %c0_64 = arith.constant 0 : index
    %55 = vector.load %arg15[%c0_63, %c0_64] : memref<16x128xf32, #tpu.memory_space<vmem>>, vector<16x128xf32>
    tpu.vector_store %arg15[%c0_63, %c0_64], %54 {strides = array<i32>} : memref<16x128xf32, #tpu.memory_space<vmem>>, vector<16x128xf32>,
    %c0_65 = arith.constant 0 : index
    %c0_66 = arith.constant 0 : index
    %56 = tpu.strided_load %arg15[%c0_65, %c0_66] {strides = array<i32: 2, 1>} : memref<16x128xf32, #tpu.memory_space<vmem>>, vector<8x128xf32>
    %c1_67 = arith.constant 1 : index
    %c0_68 = arith.constant 0 : index
    %57 = tpu.strided_load %arg15[%c1_67, %c0_68] {strides = array<i32: 2, 1>} : memref<16x128xf32, #tpu.memory_space<vmem>>, vector<8x128xf32>
    %58 = arith.maximumf %56, %57 : vector<8x128xf32>
    %cst_69 = arith.constant 0.000000e+00 : f32
    %59 = vector.broadcast %cst_69 : f32 to vector<14x128xf32>
    %c0_70 = arith.constant 0 : index
    %c0_71 = arith.constant 0 : index
    %60 = vector.load %arg18[%c0_70, %c0_71] : memref<14x128xf32, #tpu.memory_space<vmem>>, vector<14x128xf32>
    tpu.vector_store %arg18[%c0_70, %c0_71], %59 {strides = array<i32>} : memref<14x128xf32, #tpu.memory_space<vmem>>, vector<14x128xf32>,
    %c3_72 = arith.constant 3 : index
    %c0_73 = arith.constant 0 : index
    %61 = vector.load %arg18[%c3_72, %c0_73] : memref<14x128xf32, #tpu.memory_space<vmem>>, vector<8x128xf32>
    tpu.vector_store %arg18[%c3_72, %c0_73], %58 {strides = array<i32>} : memref<14x128xf32, #tpu.memory_space<vmem>>, vector<8x128xf32>,
    %c0_74 = arith.constant 0 : index
    %c0_75 = arith.constant 0 : index
    %62 = vector.load %arg18[%c0_74, %c0_75] : memref<14x128xf32, #tpu.memory_space<vmem>>, vector<8x128xf32>
    %c1_76 = arith.constant 1 : index
    %c0_77 = arith.constant 0 : index
    %63 = vector.load %arg18[%c1_76, %c0_77] : memref<14x128xf32, #tpu.memory_space<vmem>>, vector<8x128xf32>
    %c2_78 = arith.constant 2 : index
    %c0_79 = arith.constant 0 : index
    %64 = vector.load %arg18[%c2_78, %c0_79] : memref<14x128xf32, #tpu.memory_space<vmem>>, vector<8x128xf32>
    %c3_80 = arith.constant 3 : index
    %c0_81 = arith.constant 0 : index
    %65 = vector.load %arg18[%c3_80, %c0_81] : memref<14x128xf32, #tpu.memory_space<vmem>>, vector<8x128xf32>
    %c4_82 = arith.constant 4 : index
    %c0_83 = arith.constant 0 : index
    %66 = vector.load %arg18[%c4_82, %c0_83] : memref<14x128xf32, #tpu.memory_space<vmem>>, vector<8x128xf32>
    %c5_84 = arith.constant 5 : index
    %c0_85 = arith.constant 0 : index
    %67 = vector.load %arg18[%c5_84, %c0_85] : memref<14x128xf32, #tpu.memory_space<vmem>>, vector<8x128xf32>
    %c6_86 = arith.constant 6 : index
    %c0_87 = arith.constant 0 : index
    %68 = vector.load %arg18[%c6_86, %c0_87] : memref<14x128xf32, #tpu.memory_space<vmem>>, vector<8x128xf32>
    %69 = tpu.concatenate %62, %63, %64, %65, %66, %67, %68 in 1 : vector<8x128xf32>, vector<8x128xf32>, vector<8x128xf32>, vector<8x128xf32>, vector<8x128xf32>, vector<8x128xf32>, vector<8x128xf32> -> vector<8x896xf32>
    %70 = arith.truncf %69 : vector<8x896xf32> to vector<8x896xbf16>
    %c0_88 = arith.constant 0 : index
    %c0_89 = arith.constant 0 : index
    %71 = vector.load %arg8[%c0_88, %c0_89] : memref<896x256xbf16, #tpu.memory_space<vmem>>, vector<896x256xbf16>
    %cst_90 = arith.constant dense<0.000000e+00> : vector<8x256xf32>
    %72 = tpu.matmul %70, %71, %cst_90 {dimension_numbers = #tpu.dot_dimension_numbers<[1], [0], [0], [1], [0, 0, 1, 1], [], []>} : vector<8x896xbf16>, vector<896x256xbf16>, vector<8x256xf32> -> vector<8x256xf32>
    %c0_91 = arith.constant 0 : index
    %c0_92 = arith.constant 0 : index
    %73 = vector.load %arg9[%c0_91, %c0_92] : memref<1x256xf32, #tpu.memory_space<vmem>>, vector<1x256xf32>
    %74 = vector.broadcast %73 : vector<1x256xf32> to vector<8x256xf32>
    %75 = arith.addf %72, %74 : vector<8x256xf32>
    %cst_93 = arith.constant 0.000000e+00 : f32
    %76 = vector.broadcast %cst_93 : f32 to vector<8x256xf32>
    %77 = arith.maximumf %75, %76 : vector<8x256xf32>
    %78 = arith.truncf %77 : vector<8x256xf32> to vector<8x256xbf16>
    %c0_94 = arith.constant 0 : index
    %c0_95 = arith.constant 0 : index
    %79 = vector.load %arg10[%c0_94, %c0_95] : memref<256x4xbf16, #tpu.memory_space<vmem>>, vector<256x4xbf16>
    %cst_96 = arith.constant dense<0.000000e+00> : vector<8x4xf32>
    %80 = tpu.matmul %78, %79, %cst_96 {dimension_numbers = #tpu.dot_dimension_numbers<[1], [0], [0], [1], [0, 0, 1, 1], [], []>} : vector<8x256xbf16>, vector<256x4xbf16>, vector<8x4xf32> -> vector<8x4xf32>
    %c0_97 = arith.constant 0 : index
    %c0_98 = arith.constant 0 : index
    %81 = vector.load %arg11[%c0_97, %c0_98] : memref<1x4xf32, #tpu.memory_space<vmem>>, vector<1x4xf32>
    %82 = vector.broadcast %81 : vector<1x4xf32> to vector<8x4xf32>
    %83 = arith.addf %80, %82 : vector<8x4xf32>
    %c0_99 = arith.constant 0 : index
    %c0_100 = arith.constant 0 : index
    %c0_101 = arith.constant 0 : index
    %84 = vector.load %arg12[%c0_99, %c0_100, %c0_101] : memref<1x8x4xf32, #tpu.memory_space<vmem>>, vector<1x8x4xf32>
    %85 = vector.shape_cast %84 : vector<1x8x4xf32> to vector<8x4xf32>
    %86 = vector.shape_cast %83 : vector<8x4xf32> to vector<1x8x4xf32>
    tpu.vector_store %arg12[%c0_99, %c0_100, %c0_101], %86 {strides = array<i32>} : memref<1x8x4xf32, #tpu.memory_space<vmem>>, vector<1x8x4xf32>,
    return
  }
  func.func @transform_0(%arg0: i32) -> (i32, i32, i32) {
    %c0_i32 = arith.constant 0 : i32
    %c0_i32_0 = arith.constant 0 : i32
    %c0_i32_1 = arith.constant 0 : i32
    return %arg0, %c0_i32, %c0_i32_0 : i32, i32, i32
  }
  func.func @transform_1(%arg0: i32) -> (i32, i32) {
    %c0_i32 = arith.constant 0 : i32
    %c0_i32_0 = arith.constant 0 : i32
    %c0_i32_1 = arith.constant 0 : i32
    return %c0_i32, %c0_i32_0 : i32, i32
  }
  func.func @transform_2(%arg0: i32) -> (i32, i32) {
    %c0_i32 = arith.constant 0 : i32
    %c0_i32_0 = arith.constant 0 : i32
    %c0_i32_1 = arith.constant 0 : i32
    return %c0_i32, %c0_i32_0 : i32, i32
  }
  func.func @transform_3(%arg0: i32) -> (i32, i32) {
    %c0_i32 = arith.constant 0 : i32
    %c0_i32_0 = arith.constant 0 : i32
    %c0_i32_1 = arith.constant 0 : i32
    return %c0_i32, %c0_i32_0 : i32, i32
  }
  func.func @transform_4(%arg0: i32) -> (i32, i32) {
    %c0_i32 = arith.constant 0 : i32
    %c0_i32_0 = arith.constant 0 : i32
    %c0_i32_1 = arith.constant 0 : i32
    return %c0_i32, %c0_i32_0 : i32, i32
  }
  func.func @transform_5(%arg0: i32) -> (i32, i32) {
    %c0_i32 = arith.constant 0 : i32
    %c0_i32_0 = arith.constant 0 : i32
    %c0_i32_1 = arith.constant 0 : i32
    return %c0_i32, %c0_i32_0 : i32, i32
  }
  func.func @transform_6(%arg0: i32) -> (i32, i32) {
    %c0_i32 = arith.constant 0 : i32
    %c0_i32_0 = arith.constant 0 : i32
    %c0_i32_1 = arith.constant 0 : i32
    return %c0_i32, %c0_i32_0 : i32, i32
  }
  func.func @transform_7(%arg0: i32) -> (i32, i32) {
    %c0_i32 = arith.constant 0 : i32
    %c0_i32_0 = arith.constant 0 : i32
    %c0_i32_1 = arith.constant 0 : i32
    return %c0_i32, %c0_i32_0 : i32, i32
  }
  func.func @transform_8(%arg0: i32) -> (i32, i32) {
    %c0_i32 = arith.constant 0 : i32
    %c0_i32_0 = arith.constant 0 : i32
    %c0_i32_1 = arith.constant 0 : i32
    return %c0_i32, %c0_i32_0 : i32, i32
  }
  func.func @transform_9(%arg0: i32) -> (i32, i32) {
    %c0_i32 = arith.constant 0 : i32
    %c0_i32_0 = arith.constant 0 : i32
    %c0_i32_1 = arith.constant 0 : i32
    return %c0_i32, %c0_i32_0 : i32, i32
  }
  func.func @transform_10(%arg0: i32) -> (i32, i32) {
    %c0_i32 = arith.constant 0 : i32
    %c0_i32_0 = arith.constant 0 : i32
    %c0_i32_1 = arith.constant 0 : i32
    return %c0_i32, %c0_i32_0 : i32, i32
  }
  func.func @transform_11(%arg0: i32) -> (i32, i32, i32) {
    %c0_i32 = arith.constant 0 : i32
    %c0_i32_0 = arith.constant 0 : i32
    %c0_i32_1 = arith.constant 0 : i32
    return %arg0, %c0_i32, %c0_i32_0 : i32, i32, i32
  }
}

</mosaic_0001>

<llo_original>
// kernel: cnn_forward.1
$region0: #{cnn_forward.1}
  #allocation0 [shape = 'u32[]', space=smem, size = 0x4, offset = 0x4, fixed_abs, tag = 'smem constant byte address 0x4 - core index']
  #allocation1 [shape = 'u32[144,128]{1,0:T(1,128)}', space=vmem, size = 0x12000, scoped, tag = 'internal scratch']
  #allocation2 [shape = 'f32[64,32]{1,0:T(8,128)}', space=vmem, size = 0x8000, scoped, tag = 'scratch operand']
  #allocation3 [shape = 'f32[32,64]{1,0:T(8,128)}', space=vmem, size = 0x4000, scoped, tag = 'scratch operand']
  #allocation4 [shape = 'f32[16,128]{1,0:T(8,128)}', space=vmem, size = 0x2000, scoped, tag = 'scratch operand']
  #allocation5 [shape = 'f32[38,32]{1,0:T(8,128)}', space=vmem, size = 0x5000, scoped, tag = 'scratch operand']
  #allocation6 [shape = 'f32[22,64]{1,0:T(8,128)}', space=vmem, size = 0x3000, scoped, tag = 'scratch operand']
  #allocation7 [shape = 'f32[14,128]{1,0:T(8,128)}', space=vmem, size = 0x2000, scoped, tag = 'scratch operand']
  %s0 = inlined_call_operand.vmem [shape: bf16[2,64,128], index: 0, kind: input, shape index: {}]
  %s1 = inlined_call_operand.vmem [shape: bf16[128,32], index: 1, kind: input, shape index: {}]
  %s2 = inlined_call_operand.vmem [shape: f32[1,32], index: 2, kind: input, shape index: {}]
  %s3 = inlined_call_operand.vmem [shape: bf16[224,64], index: 3, kind: input, shape index: {}]
  %s4 = inlined_call_operand.vmem [shape: f32[1,64], index: 4, kind: input, shape index: {}]
  %s5 = inlined_call_operand.vmem [shape: bf16[448,128], index: 5, kind: input, shape index: {}]
  %s6 = inlined_call_operand.vmem [shape: f32[1,128], index: 6, kind: input, shape index: {}]
  %s7 = inlined_call_operand.vmem [shape: bf16[896,256], index: 7, kind: input, shape index: {}]
  %s8 = inlined_call_operand.vmem [shape: f32[1,256], index: 8, kind: input, shape index: {}]
  %s9 = inlined_call_operand.vmem [shape: bf16[256,4], index: 9, kind: input, shape index: {}]
  %s10 = inlined_call_operand.vmem [shape: f32[1,4], index: 10, kind: input, shape index: {}]
  %s11 = inlined_call_operand.vmem [shape: f32[2,8,4], index: 11, kind: output, shape index: {}]
  %s12 = sld [smem:[#allocation0]]
  $region77: #{cnn_forward.1} parent=0
    _
  %s14 = ssub.s32 1, %s12
  %s15 = scalar_select 0, %s14, %s12
  loop: start=0, step=1, limit=4
  $region2: #{cnn_forward.1} parent=0 // loop_pre_header
    _
  $region3: #{cnn_forward.1} parent=0 // loop_header
    %s17 = sphi 0, %s21
    %p18 = scmp.ge.s32.totalorder %s17, 4
    %s27 = sphi 0, %s29
    %s30 = sphi 0, %s27
    %s31 = sphi 0, %s30
    %s47 = sphi 0, %s31
    %s51 = sphi 0, %s51
    %s53 = sphi 0, %s51
    %s54 = sphi 0, %s53
    %s68 = sphi 0, %s54
    %s72 = sphi 0, %s72
    %s74 = sphi 0, %s72
    %s75 = sphi 0, %s74
    %s89 = sphi 0, %s75
    %s93 = sphi 0, %s93
    %s95 = sphi 0, %s93
    %s96 = sphi 0, %s95
    %s110 = sphi 0, %s96
    %s114 = sphi 0, %s114
    %s116 = sphi 0, %s114
    %s117 = sphi 0, %s116
    %s131 = sphi 0, %s117
    %s135 = sphi 0, %s135
    %s137 = sphi 0, %s135
    %s138 = sphi 0, %s137
    %s152 = sphi 0, %s138
    %s156 = sphi 0, %s156
    %s158 = sphi 0, %s156
    %s159 = sphi 0, %s158
    %s173 = sphi 0, %s159
    %s177 = sphi 0, %s177
    %s179 = sphi 0, %s177
    %s180 = sphi 0, %s179
    %s194 = sphi 0, %s180
    %s198 = sphi 0, %s198
    %s200 = sphi 0, %s198
    %s201 = sphi 0, %s200
    %s215 = sphi 0, %s201
    %s219 = sphi 0, %s219
    %s221 = sphi 0, %s219
    %s222 = sphi 0, %s221
    %s236 = sphi 0, %s222
    %s240 = sphi 0, %s240
    %s242 = sphi 0, %s240
    %s243 = sphi 0, %s242
    %s257 = sphi 0, %s243
    %s263 = sphi 0, %s265
    %s266 = sphi 0, %s263
    %s267 = sphi 0, %s266
    %s283 = sphi 0, %s267
  $region4: #{cnn_forward.1} parent=0 // loop_header_branch
    %20 = sbr.rel (%p18) target = $region8
  $region5: #{cnn_forward.1} parent=0 // loop_body
    %s22 = ssub.s32 %s17, 1
    %s23 = ssub.s32 %s17, 2
    %s24 = sadd.s32 %s17, 1
    %s25 = ssub.s32 %s17, %s24
    %p26 = scmp.eq.s32.totalorder %s25, 0
    %s28 = sadd.s32 %s27, 1
    %s29 = scalar_select %p26, %s27, %s28
    %p32 = pneg %p26
    %p33 = scmp.eq.s32.totalorder %s17, 1
    %p34 = por %p32, %p33
    %p35 = scmp.ne.s32.totalorder %s27, %s30
    %p36 = scmp.eq.s32.totalorder %s17, 0
    %p37 = por %p35, %p36
    %p38 = scmp.ne.s32.totalorder %s27, %s30
    %p39 = scmp.eq.s32.totalorder %s22, 1
    %p40 = por %p38, %p39
    %p41 = scmp.ne.s32.totalorder %s30, %s31
    %p42 = scmp.eq.s32.totalorder %s22, 0
    %p43 = por %p41, %p42
    %p44 = scmp.ne.s32.totalorder %s30, %s31
    %p45 = scmp.eq.s32.totalorder %s23, 1
    %p46 = por %p44, %p45
    %p48 = scmp.ne.s32.totalorder %s31, %s47
    %p49 = scmp.eq.s32.totalorder %s23, 0
    %p50 = por %p48, %p49
    %s52 = sadd.s32 %s51, 1
    %p55 = scmp.eq.s32.totalorder %s17, 1
    %p56 = scmp.ne.s32.totalorder %s51, %s53
    %p57 = scmp.eq.s32.totalorder %s17, 0
    %p58 = por %p56, %p57
    %p59 = scmp.ne.s32.totalorder %s51, %s53
    %p60 = scmp.eq.s32.totalorder %s22, 1
    %p61 = por %p59, %p60
    %p62 = scmp.ne.s32.totalorder %s53, %s54
    %p63 = scmp.eq.s32.totalorder %s22, 0
    %p64 = por %p62, %p63
    %p65 = scmp.ne.s32.totalorder %s53, %s54
    %p66 = scmp.eq.s32.totalorder %s23, 1
    %p67 = por %p65, %p66
    %p69 = scmp.ne.s32.totalorder %s54, %s68
    %p70 = scmp.eq.s32.totalorder %s23, 0
    %p71 = por %p69, %p70
    %s73 = sadd.s32 %s72, 1
    %p76 = scmp.eq.s32.totalorder %s17, 1
    %p77 = scmp.ne.s32.totalorder %s72, %s74
    %p78 = scmp.eq.s32.totalorder %s17, 0
    %p79 = por %p77, %p78
    %p80 = scmp.ne.s32.totalorder %s72, %s74
    %p81 = scmp.eq.s32.totalorder %s22, 1
    %p82 = por %p80, %p81
    %p83 = scmp.ne.s32.totalorder %s74, %s75
    %p84 = scmp.eq.s32.totalorder %s22, 0
    %p85 = por %p83, %p84
    %p86 = scmp.ne.s32.totalorder %s74, %s75
    %p87 = scmp.eq.s32.totalorder %s23, 1
    %p88 = por %p86, %p87
    %p90 = scmp.ne.s32.totalorder %s75, %s89
    %p91 = scmp.eq.s32.totalorder %s23, 0
    %p92 = por %p90, %p91
    %s94 = sadd.s32 %s93, 1
    %p97 = scmp.eq.s32.totalorder %s17, 1
    %p98 = scmp.ne.s32.totalorder %s93, %s95
    %p99 = scmp.eq.s32.totalorder %s17, 0
    %p100 = por %p98, %p99
    %p101 = scmp.ne.s32.totalorder %s93, %s95
    %p102 = scmp.eq.s32.totalorder %s22, 1
    %p103 = por %p101, %p102
    %p104 = scmp.ne.s32.totalorder %s95, %s96
    %p105 = scmp.eq.s32.totalorder %s22, 0
    %p106 = por %p104, %p105
    %p107 = scmp.ne.s32.totalorder %s95, %s96
    %p108 = scmp.eq.s32.totalorder %s23, 1
    %p109 = por %p107, %p108
    %p111 = scmp.ne.s32.totalorder %s96, %s110
    %p112 = scmp.eq.s32.totalorder %s23, 0
    %p113 = por %p111, %p112
    %s115 = sadd.s32 %s114, 1
    %p118 = scmp.eq.s32.totalorder %s17, 1
    %p119 = scmp.ne.s32.totalorder %s114, %s116
    %p120 = scmp.eq.s32.totalorder %s17, 0
    %p121 = por %p119, %p120
    %p122 = scmp.ne.s32.totalorder %s114, %s116
    %p123 = scmp.eq.s32.totalorder %s22, 1
    %p124 = por %p122, %p123
    %p125 = scmp.ne.s32.totalorder %s116, %s117
    %p126 = scmp.eq.s32.totalorder %s22, 0
    %p127 = por %p125, %p126
    %p128 = scmp.ne.s32.totalorder %s116, %s117
    %p129 = scmp.eq.s32.totalorder %s23, 1
    %p130 = por %p128, %p129
    %p132 = scmp.ne.s32.totalorder %s117, %s131
    %p133 = scmp.eq.s32.totalorder %s23, 0
    %p134 = por %p132, %p133
    %s136 = sadd.s32 %s135, 1
    %p139 = scmp.eq.s32.totalorder %s17, 1
    %p140 = scmp.ne.s32.totalorder %s135, %s137
    %p141 = scmp.eq.s32.totalorder %s17, 0
    %p142 = por %p140, %p141
    %p143 = scmp.ne.s32.totalorder %s135, %s137
    %p144 = scmp.eq.s32.totalorder %s22, 1
    %p145 = por %p143, %p144
    %p146 = scmp.ne.s32.totalorder %s137, %s138
    %p147 = scmp.eq.s32.totalorder %s22, 0
    %p148 = por %p146, %p147
    %p149 = scmp.ne.s32.totalorder %s137, %s138
    %p150 = scmp.eq.s32.totalorder %s23, 1
    %p151 = por %p149, %p150
    %p153 = scmp.ne.s32.totalorder %s138, %s152
    %p154 = scmp.eq.s32.totalorder %s23, 0
    %p155 = por %p153, %p154
    %s157 = sadd.s32 %s156, 1
    %p160 = scmp.eq.s32.totalorder %s17, 1
    %p161 = scmp.ne.s32.totalorder %s156, %s158
    %p162 = scmp.eq.s32.totalorder %s17, 0
    %p163 = por %p161, %p162
    %p164 = scmp.ne.s32.totalorder %s156, %s158
    %p165 = scmp.eq.s32.totalorder %s22, 1
    %p166 = por %p164, %p165
    %p167 = scmp.ne.s32.totalorder %s158, %s159
    %p168 = scmp.eq.s32.totalorder %s22, 0
    %p169 = por %p167, %p168
    %p170 = scmp.ne.s32.totalorder %s158, %s159
    %p171 = scmp.eq.s32.totalorder %s23, 1
    %p172 = por %p170, %p171
    %p174 = scmp.ne.s32.totalorder %s159, %s173
    %p175 = scmp.eq.s32.totalorder %s23, 0
    %p176 = por %p174, %p175
    %s178 = sadd.s32 %s177, 1
    %p181 = scmp.eq.s32.totalorder %s17, 1
    %p182 = scmp.ne.s32.totalorder %s177, %s179
    %p183 = scmp.eq.s32.totalorder %s17, 0
    %p184 = por %p182, %p183
    %p185 = scmp.ne.s32.totalorder %s177, %s179
    %p186 = scmp.eq.s32.totalorder %s22, 1
    %p187 = por %p185, %p186
    %p188 = scmp.ne.s32.totalorder %s179, %s180
    %p189 = scmp.eq.s32.totalorder %s22, 0
    %p190 = por %p188, %p189
    %p191 = scmp.ne.s32.totalorder %s179, %s180
    %p192 = scmp.eq.s32.totalorder %s23, 1
    %p193 = por %p191, %p192
    %p195 = scmp.ne.s32.totalorder %s180, %s194
    %p196 = scmp.eq.s32.totalorder %s23, 0
    %p197 = por %p195, %p196
    %s199 = sadd.s32 %s198, 1
    %p202 = scmp.eq.s32.totalorder %s17, 1
    %p203 = scmp.ne.s32.totalorder %s198, %s200
    %p204 = scmp.eq.s32.totalorder %s17, 0
    %p205 = por %p203, %p204
    %p206 = scmp.ne.s32.totalorder %s198, %s200
    %p207 = scmp.eq.s32.totalorder %s22, 1
    %p208 = por %p206, %p207
    %p209 = scmp.ne.s32.totalorder %s200, %s201
    %p210 = scmp.eq.s32.totalorder %s22, 0
    %p211 = por %p209, %p210
    %p212 = scmp.ne.s32.totalorder %s200, %s201
    %p213 = scmp.eq.s32.totalorder %s23, 1
    %p214 = por %p212, %p213
    %p216 = scmp.ne.s32.totalorder %s201, %s215
    %p217 = scmp.eq.s32.totalorder %s23, 0
    %p218 = por %p216, %p217
    %s220 = sadd.s32 %s219, 1
    %p223 = scmp.eq.s32.totalorder %s17, 1
    %p224 = scmp.ne.s32.totalorder %s219, %s221
    %p225 = scmp.eq.s32.totalorder %s17, 0
    %p226 = por %p224, %p225
    %p227 = scmp.ne.s32.totalorder %s219, %s221
    %p228 = scmp.eq.s32.totalorder %s22, 1
    %p229 = por %p227, %p228
    %p230 = scmp.ne.s32.totalorder %s221, %s222
    %p231 = scmp.eq.s32.totalorder %s22, 0
    %p232 = por %p230, %p231
    %p233 = scmp.ne.s32.totalorder %s221, %s222
    %p234 = scmp.eq.s32.totalorder %s23, 1
    %p235 = por %p233, %p234
    %p237 = scmp.ne.s32.totalorder %s222, %s236
    %p238 = scmp.eq.s32.totalorder %s23, 0
    %p239 = por %p237, %p238
    %s241 = sadd.s32 %s240, 1
    %p244 = scmp.eq.s32.totalorder %s17, 1
    %p245 = scmp.ne.s32.totalorder %s240, %s242
    %p246 = scmp.eq.s32.totalorder %s17, 0
    %p247 = por %p245, %p246
    %p248 = scmp.ne.s32.totalorder %s240, %s242
    %p249 = scmp.eq.s32.totalorder %s22, 1
    %p250 = por %p248, %p249
    %p251 = scmp.ne.s32.totalorder %s242, %s243
    %p252 = scmp.eq.s32.totalorder %s22, 0
    %p253 = por %p251, %p252
    %p254 = scmp.ne.s32.totalorder %s242, %s243
    %p255 = scmp.eq.s32.totalorder %s23, 1
    %p256 = por %p254, %p255
    %p258 = scmp.ne.s32.totalorder %s243, %s257
    %p259 = scmp.eq.s32.totalorder %s23, 0
    %p260 = por %p258, %p259
    %s261 = ssub.s32 %s17, %s24
    %p262 = scmp.eq.s32.totalorder %s261, 0
    %s264 = sadd.s32 %s263, 1
    %s265 = scalar_select %p262, %s263, %s264
    %p268 = pneg %p262
    %p269 = scmp.eq.s32.totalorder %s17, 1
    %p270 = por %p268, %p269
    %p271 = scmp.ne.s32.totalorder %s263, %s266
    %p272 = scmp.eq.s32.totalorder %s17, 0
    %p273 = por %p271, %p272
    %p274 = scmp.ne.s32.totalorder %s263, %s266
    %p275 = scmp.eq.s32.totalorder %s22, 1
    %p276 = por %p274, %p275
    %p277 = scmp.ne.s32.totalorder %s266, %s267
    %p278 = scmp.eq.s32.totalorder %s22, 0
    %p279 = por %p277, %p278
    %p280 = scmp.ne.s32.totalorder %s266, %s267
    %p281 = scmp.eq.s32.totalorder %s23, 1
    %p282 = por %p280, %p281
    %p284 = scmp.ne.s32.totalorder %s267, %s283
    %p285 = scmp.eq.s32.totalorder %s23, 0
    %p286 = por %p284, %p285
    %p287 = scmp.le.s32.totalorder 1, %s17
    %p288 = scmp.lt.s32.totalorder %s17, 3
    %p289 = pnand %p287, %p288
    %p290 = pneg %p289
    // Predicated region
    $region9: #{cnn_forward.1} parent=5 // pred_check
      _
    $region10: #{cnn_forward.1} parent=5 // pred_check_branch
      %292 = sbr.rel (%p289) target = $region12
    $region11: #{cnn_forward.1} parent=5 // pred_region
      %s293 = ssub.s32 %s17, 1
      // Predicated region
      $region13: #{cnn_forward.1} parent=11 // pred_check
        %p294 = pneg %p64
      $region14: #{cnn_forward.1} parent=11 // pred_check_branch
        %296 = sbr.rel (%p294) target = $region16
      $region15: #{cnn_forward.1} parent=11 // pred_region
        _
      $region16: #{cnn_forward.1} parent=11 // pred_fallthru
        _
      // Predicated region
      $region17: #{cnn_forward.1} parent=11 // pred_check
        %p297 = pneg %p85
      $region18: #{cnn_forward.1} parent=11 // pred_check_branch
        %299 = sbr.rel (%p297) target = $region20
      $region19: #{cnn_forward.1} parent=11 // pred_region
        _
      $region20: #{cnn_forward.1} parent=11 // pred_fallthru
        _
      // Predicated region
      $region21: #{cnn_forward.1} parent=11 // pred_check
        %p300 = pneg %p106
      $region22: #{cnn_forward.1} parent=11 // pred_check_branch
        %302 = sbr.rel (%p300) target = $region24
      $region23: #{cnn_forward.1} parent=11 // pred_region
        _
      $region24: #{cnn_forward.1} parent=11 // pred_fallthru
        _
      // Predicated region
      $region25: #{cnn_forward.1} parent=11 // pred_check
        %p303 = pneg %p127
      $region26: #{cnn_forward.1} parent=11 // pred_check_branch
        %305 = sbr.rel (%p303) target = $region28
      $region27: #{cnn_forward.1} parent=11 // pred_region
        _
      $region28: #{cnn_forward.1} parent=11 // pred_fallthru
        _
      // Predicated region
      $region29: #{cnn_forward.1} parent=11 // pred_check
        %p306 = pneg %p148
      $region30: #{cnn_forward.1} parent=11 // pred_check_branch
        %308 = sbr.rel (%p306) target = $region32
      $region31: #{cnn_forward.1} parent=11 // pred_region
        _
      $region32: #{cnn_forward.1} parent=11 // pred_fallthru
        _
      // Predicated region
      $region33: #{cnn_forward.1} parent=11 // pred_check
        %p309 = pneg %p169
      $region34: #{cnn_forward.1} parent=11 // pred_check_branch
        %311 = sbr.rel (%p309) target = $region36
      $region35: #{cnn_forward.1} parent=11 // pred_region
        _
      $region36: #{cnn_forward.1} parent=11 // pred_fallthru
        _
      // Predicated region
      $region37: #{cnn_forward.1} parent=11 // pred_check
        %p312 = pneg %p190
      $region38: #{cnn_forward.1} parent=11 // pred_check_branch
        %314 = sbr.rel (%p312) target = $region40
      $region39: #{cnn_forward.1} parent=11 // pred_region
        _
      $region40: #{cnn_forward.1} parent=11 // pred_fallthru
        _
      // Predicated region
      $region41: #{cnn_forward.1} parent=11 // pred_check
        %p315 = pneg %p211
      $region42: #{cnn_forward.1} parent=11 // pred_check_branch
        %317 = sbr.rel (%p315) target = $region44
      $region43: #{cnn_forward.1} parent=11 // pred_region
        _
      $region44: #{cnn_forward.1} parent=11 // pred_fallthru
        _
      // Predicated region
      $region45: #{cnn_forward.1} parent=11 // pred_check
        %p318 = pneg %p232
      $region46: #{cnn_forward.1} parent=11 // pred_check_branch
        %320 = sbr.rel (%p318) target = $region48
      $region47: #{cnn_forward.1} parent=11 // pred_region
        _
      $region48: #{cnn_forward.1} parent=11 // pred_fallthru
        _
      // Predicated region
      $region49: #{cnn_forward.1} parent=11 // pred_check
        %p321 = pneg %p253
      $region50: #{cnn_forward.1} parent=11 // pred_check_branch
        %323 = sbr.rel (%p321) target = $region52
      $region51: #{cnn_forward.1} parent=11 // pred_region
        _
      $region52: #{cnn_forward.1} parent=11 // pred_fallthru
        _
    $region12: #{cnn_forward.1} parent=5 // pred_fallthru
      _
    %p324 = scmp.lt.s32.totalorder %s17, 2
    // Predicated region
    $region53: #{cnn_forward.1} parent=5 // pred_check
      %p325 = pneg %p324
    $region54: #{cnn_forward.1} parent=5 // pred_check_branch
      %327 = sbr.rel (%p325) target = $region56
    $region55: #{cnn_forward.1} parent=5 // pred_region
      // Predicated region
      $region57: #{cnn_forward.1} parent=55 // pred_check
        %p328 = pneg %p37
      $region58: #{cnn_forward.1} parent=55 // pred_check_branch
        %330 = sbr.rel (%p328) target = $region60
      $region59: #{cnn_forward.1} parent=55 // pred_region
        %p331 = scmp.lt.s32.totalorder %s17, 1
        %s332 = scalar_select %p331, %s17, 1
        %s333 = smul.addr %s332, 8
        %s334 = smul.addr %s333, 4
        %s335 = scalar_lea.vmem %s0, %s334
      $region60: #{cnn_forward.1} parent=55 // pred_fallthru
        _
    $region56: #{cnn_forward.1} parent=5 // pred_fallthru
      _
    %p336 = scmp.le.s32.totalorder 1, %s17
    %p337 = scmp.lt.s32.totalorder %s17, 3
    %p338 = pnand %p336, %p337
    %p339 = pneg %p338
    // Predicated region
    $region61: #{cnn_forward.1} parent=5 // pred_check
      _
    $region62: #{cnn_forward.1} parent=5 // pred_check_branch
      %341 = sbr.rel (%p338) target = $region64
    $region63: #{cnn_forward.1} parent=5 // pred_region
      %s342 = ssub.s32 %s17, 1
      %p343 = scmp.lt.s32.totalorder %s22, 1
      %s344 = scalar_select %p343, %s22, 1
      %s345 = smul.addr %s344, 8
      %s346 = smul.addr %s345, 4
      %s347 = scalar_lea.vmem %s0, %s346
      %p348 = pneg %p43
      %p349 = pneg %p40
      %p350 = pneg %p64
      %p351 = pneg %p61
      %p352 = pneg %p85
      %p353 = pneg %p82
      %p354 = pneg %p106
      %p355 = pneg %p103
      %p356 = pneg %p127
      %p357 = pneg %p124
      %p358 = pneg %p148
      %p359 = pneg %p145
      %p360 = pneg %p169
      %p361 = pneg %p166
      %p362 = pneg %p190
      %p363 = pneg %p187
      %p364 = pneg %p211
      %p365 = pneg %p208
      %p366 = pneg %p232
      %p367 = pneg %p229
      %p368 = pneg %p253
      %p369 = pneg %p250
      %p370 = pneg %p279
      %p371 = pneg %p276
      %p372 = scmp.lt.s32.totalorder %s22, 1
      %s373 = scalar_select %p372, %s22, 1
      %s374 = smul.addr %s373, 8
      %s375 = scalar_lea.vmem %s11, %s374
      %p376 = scmp.lt.s32.totalorder %s22, 1
      %s377 = scalar_select %p376, %s22, 1
      %s378 = smul.addr %s377, 8
      %s379 = smul.addr %s378, 4
      %s380 = scalar_lea.vmem %s0, %s379
      %p381 = scmp.lt.s32.totalorder %s22, 1
      %s382 = scalar_select %p381, %s22, 1
      %s383 = smul.addr %s382, 8
      %s384 = scalar_lea.vmem %s11, %s383
      %v386 = vld [vmem:[%s380] sm:$0xf]
      %v387 = vld [vmem:[%s380 + $0x4] sm:$0xf]
      %v388 = vld [vmem:[%s380 + $0x8] sm:$0xf]
      %v389 = vld [vmem:[%s380 + $0xc] sm:$0xf]
      %v390 = vld [vmem:[%s380 + $0x10] sm:$0xf]
      %v391 = vld [vmem:[%s380 + $0x14] sm:$0xf]
      %v392 = vld [vmem:[%s380 + $0x18] sm:$0xf]
      %v393 = vld [vmem:[%s380 + $0x1c] sm:$0xf]
      %v394 = vld [vmem:[%s1] sm:$0xf]
      %v395 = vld [vmem:[%s1 + $0x4] sm:$0xf]
      %v396 = vld [vmem:[%s1 + $0x8] sm:$0xf]
      %v397 = vld [vmem:[%s1 + $0xc] sm:$0xf]
      %v398 = vld [vmem:[%s1 + $0x10] sm:$0xf]
      %v399 = vld [vmem:[%s1 + $0x14] sm:$0xf]
      %v400 = vld [vmem:[%s1 + $0x18] sm:$0xf]
      %v401 = vld [vmem:[%s1 + $0x1c] sm:$0xf]
      %v402 = vld [vmem:[%s1 + $0x20] sm:$0xf]
      %v403 = vld [vmem:[%s1 + $0x24] sm:$0xf]
      %v404 = vld [vmem:[%s1 + $0x28] sm:$0xf]
      %v405 = vld [vmem:[%s1 + $0x2c] sm:$0xf]
      %v406 = vld [vmem:[%s1 + $0x30] sm:$0xf]
      %v407 = vld [vmem:[%s1 + $0x34] sm:$0xf]
      %v408 = vld [vmem:[%s1 + $0x38] sm:$0xf]
      %v409 = vld [vmem:[%s1 + $0x3c] sm:$0xf]
      %v410 = vld [vmem:[%s2] sm:$0x1]
      %v412 = vlaneseq
      %v413 = vshrl.u32 %v412, 7
      %v414 = vsub.s32 0, %v413
      %v415 = vrot.slane %v410, %v414
      %v425 = vunpack.c.l.b16 %v386
      %v426 = vunpack.c.l.b16 %v387
      %v427 = vunpack.c.l.b16 %v388
      %v428 = vunpack.c.l.b16 %v389
      %v429 = vunpack.c.l.b16 %v390
      %v430 = vunpack.c.l.b16 %v391
      %v431 = vunpack.c.l.b16 %v392
      %v432 = vunpack.c.l.b16 %v393
      %v433 = vpack.c.b16 %v426, %v425
      %v434 = vpack.c.b16 %v428, %v427
      %v435 = vpack.c.b16 %v430, %v429
      %v436 = vpack.c.b16 %v432, %v431
      %v457 = vunpack.c.l.b16 %v394
      %v458 = vunpack.c.l.b16 %v395
      %v459 = vunpack.c.l.b16 %v396
      %v460 = vunpack.c.l.b16 %v397
      %v461 = vunpack.c.l.b16 %v398
      %v462 = vunpack.c.l.b16 %v399
      %v463 = vunpack.c.l.b16 %v400
      %v464 = vunpack.c.l.b16 %v401
      %v465 = vunpack.c.l.b16 %v402
      %v466 = vunpack.c.l.b16 %v403
      %v467 = vunpack.c.l.b16 %v404
      %v468 = vunpack.c.l.b16 %v405
      %v469 = vunpack.c.l.b16 %v406
      %v470 = vunpack.c.l.b16 %v407
      %v471 = vunpack.c.l.b16 %v408
      %v472 = vunpack.c.l.b16 %v409
      %v473 = vpack.c.b16 %v458, %v457
      %v474 = vpack.c.b16 %v460, %v459
      %v475 = vpack.c.b16 %v462, %v461
      %v476 = vpack.c.b16 %v464, %v463
      %v477 = vpack.c.b16 %v466, %v465
      %v478 = vpack.c.b16 %v468, %v467
      %v479 = vpack.c.b16 %v470, %v469
      %v480 = vpack.c.b16 %v472, %v471
      %489 = vmatprep.subr.bf16.mxu0 0
      %490 = vmatpush1.bf16.msra.mxu0 %v480
      %491 = vmatprep.subr.bf16.mxu0 0
      %492 = vmatpush1.bf16.msra.mxu0 %v479
      %493 = vmatprep.subr.bf16.mxu0 0
      %494 = vmatpush1.bf16.msra.mxu0 %v478
      %495 = vmatprep.subr.bf16.mxu0 0
      %496 = vmatpush1.bf16.msra.mxu0 %v477
      %497 = vmatprep.subr.bf16.mxu0 0
      %498 = vmatpush1.bf16.msra.mxu0 %v476
      %499 = vmatprep.subr.bf16.mxu0 0
      %500 = vmatpush1.bf16.msra.mxu0 %v475
      %501 = vmatprep.subr.bf16.mxu0 0
      %502 = vmatpush1.bf16.msra.mxu0 %v474
      %503 = vmatprep.subr.bf16.mxu0 0
      %504 = vmatpush1.bf16.msra.mxu0 %v473
      %505 = vmatprep.subr.bf16.mxu0 0
      %506 = vmatpush2.bf16.msra.mxu0 0
      %507 = vmatprep.subr.bf16.mxu0 0
      %508 = vmatpush2.bf16.msra.mxu0 0
      %509 = vmatprep.subr.bf16.mxu0 0
      %510 = vmatpush2.bf16.msra.mxu0 0
      %511 = vmatprep.subr.bf16.mxu0 0
      %512 = vmatpush2.bf16.msra.mxu0 0
      %513 = vmatprep.subr.bf16.mxu0 0
      %514 = vmatpush2.bf16.msra.mxu0 0
      %515 = vmatprep.subr.bf16.mxu0 0
      %516 = vmatpush2.bf16.msra.mxu0 0
      %517 = vmatprep.subr.bf16.mxu0 0
      %518 = vmatpush2.bf16.msra.mxu0 0
      %519 = vmatprep.subr.bf16.mxu0 0
      %520 = vmatpush2.bf16.msra.mxu0 0
      %521 = vmatprep.mubr.bf16.mxu0 0
      %522 = vmatmul.mubr.bf16.gmra.mxu0 %v433
      %v523 = vpop.f32.mrf.mxu0
      %v524 = vadd.f32 %v415, %v523
      %v525 = vpop.f32.mrf.mxu0
      %v526 = vpop.f32.mrf.mxu0
      %v527 = vadd.f32 %v415, %v526
      %v528 = vpop.f32.mrf.mxu0
      %529 = vmatprep.mubr.bf16.mxu0 0
      %530 = vmatmul.mubr.bf16.gmra.mxu0 %v434
      %v531 = vpop.f32.mrf.mxu0
      %v532 = vadd.f32 %v415, %v531
      %v533 = vpop.f32.mrf.mxu0
      %v534 = vpop.f32.mrf.mxu0
      %v535 = vadd.f32 %v415, %v534
      %v536 = vpop.f32.mrf.mxu0
      %537 = vmatprep.mubr.bf16.mxu0 0
      %538 = vmatmul.mubr.bf16.gmra.mxu0 %v435
      %v539 = vpop.f32.mrf.mxu0
      %v540 = vadd.f32 %v415, %v539
      %v541 = vpop.f32.mrf.mxu0
      %v542 = vpop.f32.mrf.mxu0
      %v543 = vadd.f32 %v415, %v542
      %v544 = vpop.f32.mrf.mxu0
      %545 = vmatprep.mubr.bf16.mxu0 0
      %546 = vmatmul.mubr.bf16.gmra.mxu0 %v436
      %v547 = vpop.f32.mrf.mxu0
      %v548 = vadd.f32 %v415, %v547
      %v549 = vpop.f32.mrf.mxu0
      %v550 = vpop.f32.mrf.mxu0
      %v551 = vadd.f32 %v415, %v550
      %v552 = vpop.f32.mrf.mxu0
      %553 = vdwg.mxu0
      %v554 = vmax.f32 %v524, 0.0
      %v555 = vmax.f32 %v527, 0.0
      %v556 = vmax.f32 %v532, 0.0
      %v557 = vmax.f32 %v535, 0.0
      %v558 = vmax.f32 %v540, 0.0
      %v559 = vmax.f32 %v543, 0.0
      %v560 = vmax.f32 %v548, 0.0
      %v561 = vmax.f32 %v551, 0.0
      %vm562 = vcmask 261120
      %563 = vst.msk [vmem:[#allocation2] sm:$0xff] %vm562, %v554
      %564 = vst.msk [vmem:[#allocation2 + $0x8] sm:$0xff] %vm562, %v555
      %565 = vst.msk [vmem:[#allocation2 + $0x10] sm:$0xff] %vm562, %v556
      %566 = vst.msk [vmem:[#allocation2 + $0x18] sm:$0xff] %vm562, %v557
      %567 = vst.msk [vmem:[#allocation2 + $0x20] sm:$0xff] %vm562, %v558
      %568 = vst.msk [vmem:[#allocation2 + $0x28] sm:$0xff] %vm562, %v559
      %569 = vst.msk [vmem:[#allocation2 + $0x30] sm:$0xff] %vm562, %v560
      %570 = vst.msk [vmem:[#allocation2 + $0x38] sm:$0xff] %vm562, %v561
      %v571 = vld [vmem:[#allocation2] ss:$2 sm:$0xff]
      %s572 = scalar_lea.vmem [#allocation2], 16
      %v573 = vld [vmem:[%s572] ss:$2 sm:$0xff]
      %s574 = scalar_lea.vmem [#allocation2], 32
      %v575 = vld [vmem:[%s574] ss:$2 sm:$0xff]
      %s576 = scalar_lea.vmem [#allocation2], 48
      %v577 = vld [vmem:[%s576] ss:$2 sm:$0xff]
      %s578 = scalar_lea.vmem [#allocation2], 1
      %v579 = vld [vmem:[%s578] ss:$2 sm:$0xff]
      %s580 = scalar_lea.vmem [#allocation2], 17
      %v581 = vld [vmem:[%s580] ss:$2 sm:$0xff]
      %s582 = scalar_lea.vmem [#allocation2], 33
      %v583 = vld [vmem:[%s582] ss:$2 sm:$0xff]
      %s584 = scalar_lea.vmem [#allocation2], 49
      %v585 = vld [vmem:[%s584] ss:$2 sm:$0xff]
      %v586 = vmax.f32 %v571, %v579
      %v587 = vmax.f32 %v573, %v581
      %v588 = vmax.f32 %v575, %v583
      %v589 = vmax.f32 %v577, %v585
      %590 = vst.msk [vmem:[#allocation5] sm:$0xff] %vm562, 0.0
      %591 = vst.msk [vmem:[#allocation5 + $0x8] sm:$0xff] %vm562, 0.0
      %592 = vst.msk [vmem:[#allocation5 + $0x10] sm:$0xff] %vm562, 0.0
      %593 = vst.msk [vmem:[#allocation5 + $0x18] sm:$0xff] %vm562, 0.0
      %vm594 = vcmask 259072
      %595 = vst.msk [vmem:[#allocation5 + $0x20] sm:$0x3f] %vm594, 0.0
      %596 = vst.msk [vmem:[#allocation5 + $0x3] sm:$0xff] %vm562, %v586
      %597 = vst.msk [vmem:[#allocation5 + $0xb] sm:$0xff] %vm562, %v587
      %598 = vst.msk [vmem:[#allocation5 + $0x13] sm:$0xff] %vm562, %v588
      %599 = vst.msk [vmem:[#allocation5 + $0x1b] sm:$0xff] %vm562, %v589
      %v600 = vld [vmem:[#allocation5] sm:$0xff]
      %v601 = vld [vmem:[#allocation5 + $0x8] sm:$0xff]
      %v602 = vld [vmem:[#allocation5 + $0x10] sm:$0xff]
      %v603 = vld [vmem:[#allocation5 + $0x18] sm:$0xff]
      %v604 = vld [vmem:[#allocation5 + $0x1] sm:$0xff]
      %v605 = vld [vmem:[#allocation5 + $0x9] sm:$0xff]
      %v606 = vld [vmem:[#allocation5 + $0x11] sm:$0xff]
      %v607 = vld [vmem:[#allocation5 + $0x19] sm:$0xff]
      %v608 = vld [vmem:[#allocation5 + $0x2] sm:$0xff]
      %v609 = vld [vmem:[#allocation5 + $0xa] sm:$0xff]
      %v610 = vld [vmem:[#allocation5 + $0x12] sm:$0xff]
      %v611 = vld [vmem:[#allocation5 + $0x1a] sm:$0xff]
      %v612 = vld [vmem:[#allocation5 + $0x3] sm:$0xff]
      %v613 = vld [vmem:[#allocation5 + $0xb] sm:$0xff]
      %v614 = vld [vmem:[#allocation5 + $0x13] sm:$0xff]
      %v615 = vld [vmem:[#allocation5 + $0x1b] sm:$0xff]
      %v616 = vld [vmem:[#allocation5 + $0x4] sm:$0xff]
      %v617 = vld [vmem:[#allocation5 + $0xc] sm:$0xff]
      %v618 = vld [vmem:[#allocation5 + $0x14] sm:$0xff]
      %v619 = vld [vmem:[#allocation5 + $0x1c] sm:$0xff]
      %v620 = vld [vmem:[#allocation5 + $0x5] sm:$0xff]
      %v621 = vld [vmem:[#allocation5 + $0xd] sm:$0xff]
      %v622 = vld [vmem:[#allocation5 + $0x15] sm:$0xff]
      %v623 = vld [vmem:[#allocation5 + $0x1d] sm:$0xff]
      %v624 = vld [vmem:[#allocation5 + $0x6] sm:$0xff]
      %v625 = vld [vmem:[#allocation5 + $0xe] sm:$0xff]
      %v626 = vld [vmem:[#allocation5 + $0x16] sm:$0xff]
      %v627 = vld [vmem:[#allocation5 + $0x1e] sm:$0xff]
      %632 = vrot.lane.b32.xlu0 %v604, 32
      %v633 = vpop.permute.xlu0 %632
      %634 = vrot.lane.b32.xlu0 %v605, 32
      %v635 = vpop.permute.xlu0 %634
      %636 = vrot.lane.b32.xlu0 %v606, 32
      %v637 = vpop.permute.xlu0 %636
      %638 = vrot.lane.b32.xlu0 %v607, 32
      %v639 = vpop.permute.xlu0 %638
      %648 = vrot.lane.b32.xlu0 %v608, 64
      %v649 = vpop.permute.xlu0 %648
      %650 = vrot.lane.b32.xlu0 %v609, 64
      %v651 = vpop.permute.xlu0 %650
      %652 = vrot.lane.b32.xlu0 %v610, 64
      %v653 = vpop.permute.xlu0 %652
      %654 = vrot.lane.b32.xlu0 %v611, 64
      %v655 = vpop.permute.xlu0 %654
      %664 = vrot.lane.b32.xlu0 %v612, 96
      %v665 = vpop.permute.xlu0 %664
      %666 = vrot.lane.b32.xlu0 %v613, 96
      %v667 = vpop.permute.xlu0 %666
      %668 = vrot.lane.b32.xlu0 %v614, 96
      %v669 = vpop.permute.xlu0 %668
      %670 = vrot.lane.b32.xlu0 %v615, 96
      %v671 = vpop.permute.xlu0 %670
      %680 = vrot.lane.b32.xlu0 %v620, 32
      %v681 = vpop.permute.xlu0 %680
      %682 = vrot.lane.b32.xlu0 %v621, 32
      %v683 = vpop.permute.xlu0 %682
      %684 = vrot.lane.b32.xlu0 %v622, 32
      %v685 = vpop.permute.xlu0 %684
      %686 = vrot.lane.b32.xlu0 %v623, 32
      %v687 = vpop.permute.xlu0 %686
      %696 = vrot.lane.b32.xlu0 %v624, 64
      %v697 = vpop.permute.xlu0 %696
      %698 = vrot.lane.b32.xlu0 %v625, 64
      %v699 = vpop.permute.xlu0 %698
      %700 = vrot.lane.b32.xlu0 %v626, 64
      %v701 = vpop.permute.xlu0 %700
      %702 = vrot.lane.b32.xlu0 %v627, 64
      %v703 = vpop.permute.xlu0 %702
      %v708 = vsel %vm562, %v600, %v633
      %v709 = vsel %vm562, %v601, %v635
      %v710 = vsel %vm562, %v602, %v637
      %v711 = vsel %vm562, %v603, %v639
      %vm712 = vcmask 523264
      %v713 = vsel %vm712, %v708, %v649
      %v714 = vsel %vm712, %v709, %v651
      %v715 = vsel %vm712, %v710, %v653
      %v716 = vsel %vm712, %v711, %v655
      %vm717 = vcmask 785408
      %v718 = vsel %vm717, %v713, %v665
      %v719 = vsel %vm717, %v714, %v667
      %v720 = vsel %vm717, %v715, %v669
      %v721 = vsel %vm717, %v716, %v671
      %v722 = vsel %vm562, %v616, %v681
      %v723 = vsel %vm562, %v617, %v683
      %v724 = vsel %vm562, %v618, %v685
      %v725 = vsel %vm562, %v619, %v687
      %v726 = vsel %vm712, %v722, %v697
      %v727 = vsel %vm712, %v723, %v699
      %v728 = vsel %vm712, %v724, %v701
      %v729 = vsel %vm712, %v725, %v703
      %v730 = vpack.c.bf16 %v719, %v718
      %v731 = vpack.c.bf16 %v727, %v726
      %v732 = vpack.c.bf16 %v721, %v720
      %v733 = vpack.c.bf16 %v729, %v728
      %v734 = vld [vmem:[%s3] sm:$0xf]
      %v735 = vld [vmem:[%s3 + $0x4] sm:$0xf]
      %v736 = vld [vmem:[%s3 + $0x8] sm:$0xf]
      %v737 = vld [vmem:[%s3 + $0xc] sm:$0xf]
      %v738 = vld [vmem:[%s3 + $0x10] sm:$0xf]
      %v739 = vld [vmem:[%s3 + $0x14] sm:$0xf]
      %v740 = vld [vmem:[%s3 + $0x18] sm:$0xf]
      %v741 = vld [vmem:[%s3 + $0x1c] sm:$0xf]
      %v742 = vld [vmem:[%s3 + $0x20] sm:$0xf]
      %v743 = vld [vmem:[%s3 + $0x24] sm:$0xf]
      %v744 = vld [vmem:[%s3 + $0x28] sm:$0xf]
      %v745 = vld [vmem:[%s3 + $0x2c] sm:$0xf]
      %v746 = vld [vmem:[%s3 + $0x30] sm:$0xf]
      %v747 = vld [vmem:[%s3 + $0x34] sm:$0xf]
      %v748 = vld [vmem:[%s3 + $0x38] sm:$0xf]
      %v749 = vld [vmem:[%s3 + $0x3c] sm:$0xf]
      %v750 = vld [vmem:[%s3 + $0x40] sm:$0xf]
      %v751 = vld [vmem:[%s3 + $0x44] sm:$0xf]
      %v752 = vld [vmem:[%s3 + $0x48] sm:$0xf]
      %v753 = vld [vmem:[%s3 + $0x4c] sm:$0xf]
      %v754 = vld [vmem:[%s3 + $0x50] sm:$0xf]
      %v755 = vld [vmem:[%s3 + $0x54] sm:$0xf]
      %v756 = vld [vmem:[%s3 + $0x58] sm:$0xf]
      %v757 = vld [vmem:[%s3 + $0x5c] sm:$0xf]
      %v758 = vld [vmem:[%s3 + $0x60] sm:$0xf]
      %v759 = vld [vmem:[%s3 + $0x64] sm:$0xf]
      %v760 = vld [vmem:[%s3 + $0x68] sm:$0xf]
      %v761 = vld [vmem:[%s3 + $0x6c] sm:$0xf]
      %v762 = vld [vmem:[%s4] sm:$0x1]
      %v764 = vlaneseq
      %v765 = vshrl.u32 %v764, 7
      %v766 = vsub.s32 0, %v765
      %v767 = vrot.slane %v762, %v766
      %v797 = vunpack.c.l.b16 %v734
      %v798 = vunpack.c.l.b16 %v735
      %v799 = vunpack.c.l.b16 %v736
      %v800 = vunpack.c.l.b16 %v737
      %v801 = vunpack.c.l.b16 %v738
      %v802 = vunpack.c.l.b16 %v739
      %v803 = vunpack.c.l.b16 %v740
      %v804 = vunpack.c.l.b16 %v741
      %v805 = vunpack.c.l.b16 %v742
      %v806 = vunpack.c.l.b16 %v743
      %v807 = vunpack.c.l.b16 %v744
      %v808 = vunpack.c.l.b16 %v745
      %v809 = vunpack.c.l.b16 %v746
      %v810 = vunpack.c.l.b16 %v747
      %v811 = vunpack.c.l.b16 %v748
      %v812 = vunpack.c.l.b16 %v749
      %v813 = vunpack.c.l.b16 %v750
      %v814 = vunpack.c.l.b16 %v751
      %v815 = vunpack.c.l.b16 %v752
      %v816 = vunpack.c.l.b16 %v753
      %v817 = vunpack.c.l.b16 %v754
      %v818 = vunpack.c.l.b16 %v755
      %v819 = vunpack.c.l.b16 %v756
      %v820 = vunpack.c.l.b16 %v757
      %v821 = vunpack.c.l.b16 %v758
      %v822 = vunpack.c.l.b16 %v759
      %v823 = vunpack.c.l.b16 %v760
      %v824 = vunpack.c.l.b16 %v761
      %v825 = vpack.c.b16 %v798, %v797
      %v826 = vpack.c.b16 %v800, %v799
      %v827 = vpack.c.b16 %v802, %v801
      %v828 = vpack.c.b16 %v804, %v803
      %v829 = vpack.c.b16 %v806, %v805
      %v830 = vpack.c.b16 %v808, %v807
      %v831 = vpack.c.b16 %v810, %v809
      %v832 = vpack.c.b16 %v812, %v811
      %v833 = vpack.c.b16 %v814, %v813
      %v834 = vpack.c.b16 %v816, %v815
      %v835 = vpack.c.b16 %v818, %v817
      %v836 = vpack.c.b16 %v820, %v819
      %v837 = vpack.c.b16 %v822, %v821
      %v838 = vpack.c.b16 %v824, %v823
      %v854 = vsel %vm717, %v731, 0
      %v857 = vsel %vm717, %v733, 0
      %859 = vmatprep.subr.bf16.mxu0 0
      %860 = vmatpush1.bf16.msra.mxu0 %v832
      %861 = vmatprep.subr.bf16.mxu0 0
      %862 = vmatpush1.bf16.msra.mxu0 %v831
      %863 = vmatprep.subr.bf16.mxu0 0
      %864 = vmatpush1.bf16.msra.mxu0 %v830
      %865 = vmatprep.subr.bf16.mxu0 0
      %866 = vmatpush1.bf16.msra.mxu0 %v829
      %867 = vmatprep.subr.bf16.mxu0 0
      %868 = vmatpush1.bf16.msra.mxu0 %v828
      %869 = vmatprep.subr.bf16.mxu0 0
      %870 = vmatpush1.bf16.msra.mxu0 %v827
      %871 = vmatprep.subr.bf16.mxu0 0
      %872 = vmatpush1.bf16.msra.mxu0 %v826
      %873 = vmatprep.subr.bf16.mxu0 0
      %874 = vmatpush1.bf16.msra.mxu0 %v825
      %875 = vmatprep.subr.bf16.mxu0 0
      %876 = vmatpush2.bf16.msra.mxu0 0
      %877 = vmatprep.subr.bf16.mxu0 0
      %878 = vmatpush2.bf16.msra.mxu0 0
      %879 = vmatprep.subr.bf16.mxu0 0
      %880 = vmatpush2.bf16.msra.mxu0 %v838
      %881 = vmatprep.subr.bf16.mxu0 0
      %882 = vmatpush2.bf16.msra.mxu0 %v837
      %883 = vmatprep.subr.bf16.mxu0 0
      %884 = vmatpush2.bf16.msra.mxu0 %v836
      %885 = vmatprep.subr.bf16.mxu0 0
      %886 = vmatpush2.bf16.msra.mxu0 %v835
      %887 = vmatprep.subr.bf16.mxu0 0
      %888 = vmatpush2.bf16.msra.mxu0 %v834
      %889 = vmatprep.subr.bf16.mxu0 0
      %890 = vmatpush2.bf16.msra.mxu0 %v833
      %891 = vmatprep.mubr.bf16.mxu0 %v854
      %892 = vmatmul.mubr.bf16.gmra.mxu0 %v730
      %v893 = vpop.f32.mrf.mxu0
      %v894 = vadd.f32 %v767, %v893
      %v895 = vpop.f32.mrf.mxu0
      %v896 = vpop.f32.mrf.mxu0
      %v897 = vadd.f32 %v767, %v896
      %v898 = vpop.f32.mrf.mxu0
      %899 = vmatprep.mubr.bf16.mxu0 %v857
      %900 = vmatmul.mubr.bf16.gmra.mxu0 %v732
      %v901 = vpop.f32.mrf.mxu0
      %v902 = vadd.f32 %v767, %v901
      %v903 = vpop.f32.mrf.mxu0
      %v904 = vpop.f32.mrf.mxu0
      %v905 = vadd.f32 %v767, %v904
      %v906 = vpop.f32.mrf.mxu0
      %907 = vdwg.mxu0
      %v908 = vmax.f32 %v894, 0.0
      %v909 = vmax.f32 %v897, 0.0
      %v910 = vmax.f32 %v902, 0.0
      %v911 = vmax.f32 %v905, 0.0
      %912 = vst.msk [vmem:[#allocation3] sm:$0xff] %vm712, %v908
      %913 = vst.msk [vmem:[#allocation3 + $0x8] sm:$0xff] %vm712, %v909
      %914 = vst.msk [vmem:[#allocation3 + $0x10] sm:$0xff] %vm712, %v910
      %915 = vst.msk [vmem:[#allocation3 + $0x18] sm:$0xff] %vm712, %v911
      %v916 = vld [vmem:[#allocation3] ss:$2 sm:$0xff]
      %s917 = scalar_lea.vmem [#allocation3], 16
      %v918 = vld [vmem:[%s917] ss:$2 sm:$0xff]
      %s919 = scalar_lea.vmem [#allocation3], 1
      %v920 = vld [vmem:[%s919] ss:$2 sm:$0xff]
      %s921 = scalar_lea.vmem [#allocation3], 17
      %v922 = vld [vmem:[%s921] ss:$2 sm:$0xff]
      %v923 = vmax.f32 %v916, %v920
      %v924 = vmax.f32 %v918, %v922
      %925 = vst.msk [vmem:[#allocation6] sm:$0xff] %vm712, 0.0
      %926 = vst.msk [vmem:[#allocation6 + $0x8] sm:$0xff] %vm712, 0.0
      %vm927 = vcmask 521216
      %928 = vst.msk [vmem:[#allocation6 + $0x10] sm:$0x3f] %vm927, 0.0
      %929 = vst.msk [vmem:[#allocation6 + $0x3] sm:$0xff] %vm712, %v923
      %930 = vst.msk [vmem:[#allocation6 + $0xb] sm:$0xff] %vm712, %v924
      %v931 = vld [vmem:[#allocation6] sm:$0xff]
      %v932 = vld [vmem:[#allocation6 + $0x8] sm:$0xff]
      %v933 = vld [vmem:[#allocation6 + $0x1] sm:$0xff]
      %v934 = vld [vmem:[#allocation6 + $0x9] sm:$0xff]
      %v935 = vld [vmem:[#allocation6 + $0x2] sm:$0xff]
      %v936 = vld [vmem:[#allocation6 + $0xa] sm:$0xff]
      %v937 = vld [vmem:[#allocation6 + $0x3] sm:$0xff]
      %v938 = vld [vmem:[#allocation6 + $0xb] sm:$0xff]
      %v939 = vld [vmem:[#allocation6 + $0x4] sm:$0xff]
      %v940 = vld [vmem:[#allocation6 + $0xc] sm:$0xff]
      %v941 = vld [vmem:[#allocation6 + $0x5] sm:$0xff]
      %v942 = vld [vmem:[#allocation6 + $0xd] sm:$0xff]
      %v943 = vld [vmem:[#allocation6 + $0x6] sm:$0xff]
      %v944 = vld [vmem:[#allocation6 + $0xe] sm:$0xff]
      %947 = vrot.lane.b32.xlu0 %v933, 64
      %v948 = vpop.permute.xlu0 %947
      %949 = vrot.lane.b32.xlu0 %v934, 64
      %v950 = vpop.permute.xlu0 %949
      %955 = vrot.lane.b32.xlu0 %v937, 64
      %v956 = vpop.permute.xlu0 %955
      %957 = vrot.lane.b32.xlu0 %v938, 64
      %v958 = vpop.permute.xlu0 %957
      %963 = vrot.lane.b32.xlu0 %v941, 64
      %v964 = vpop.permute.xlu0 %963
      %965 = vrot.lane.b32.xlu0 %v942, 64
      %v966 = vpop.permute.xlu0 %965
      %v969 = vsel %vm712, %v931, %v948
      %v970 = vsel %vm712, %v932, %v950
      %v971 = vsel %vm712, %v935, %v956
      %v972 = vsel %vm712, %v936, %v958
      %v973 = vsel %vm712, %v939, %v964
      %v974 = vsel %vm712, %v940, %v966
      %v975 = vpack.c.bf16 %v970, %v969
      %v976 = vpack.c.bf16 %v972, %v971
      %v977 = vpack.c.bf16 %v974, %v973
      %v978 = vpack.c.bf16 %v944, %v943
      %v979 = vld [vmem:[%s5] sm:$0xf]
      %v980 = vld [vmem:[%s5 + $0x4] sm:$0xf]
      %v981 = vld [vmem:[%s5 + $0x8] sm:$0xf]
      %v982 = vld [vmem:[%s5 + $0xc] sm:$0xf]
      %v983 = vld [vmem:[%s5 + $0x10] sm:$0xf]
      %v984 = vld [vmem:[%s5 + $0x14] sm:$0xf]
      %v985 = vld [vmem:[%s5 + $0x18] sm:$0xf]
      %v986 = vld [vmem:[%s5 + $0x1c] sm:$0xf]
      %v987 = vld [vmem:[%s5 + $0x20] sm:$0xf]
      %v988 = vld [vmem:[%s5 + $0x24] sm:$0xf]
      %v989 = vld [vmem:[%s5 + $0x28] sm:$0xf]
      %v990 = vld [vmem:[%s5 + $0x2c] sm:$0xf]
      %v991 = vld [vmem:[%s5 + $0x30] sm:$0xf]
      %v992 = vld [vmem:[%s5 + $0x34] sm:$0xf]
      %v993 = vld [vmem:[%s5 + $0x38] sm:$0xf]
      %v994 = vld [vmem:[%s5 + $0x3c] sm:$0xf]
      %v995 = vld [vmem:[%s5 + $0x40] sm:$0xf]
      %v996 = vld [vmem:[%s5 + $0x44] sm:$0xf]
      %v997 = vld [vmem:[%s5 + $0x48] sm:$0xf]
      %v998 = vld [vmem:[%s5 + $0x4c] sm:$0xf]
      %v999 = vld [vmem:[%s5 + $0x50] sm:$0xf]
      %v1000 = vld [vmem:[%s5 + $0x54] sm:$0xf]
      %v1001 = vld [vmem:[%s5 + $0x58] sm:$0xf]
      %v1002 = vld [vmem:[%s5 + $0x5c] sm:$0xf]
      %v1003 = vld [vmem:[%s5 + $0x60] sm:$0xf]
      %v1004 = vld [vmem:[%s5 + $0x64] sm:$0xf]
      %v1005 = vld [vmem:[%s5 + $0x68] sm:$0xf]
      %v1006 = vld [vmem:[%s5 + $0x6c] sm:$0xf]
      %v1007 = vld [vmem:[%s5 + $0x70] sm:$0xf]
      %v1008 = vld [vmem:[%s5 + $0x74] sm:$0xf]
      %v1009 = vld [vmem:[%s5 + $0x78] sm:$0xf]
      %v1010 = vld [vmem:[%s5 + $0x7c] sm:$0xf]
      %v1011 = vld [vmem:[%s5 + $0x80] sm:$0xf]
      %v1012 = vld [vmem:[%s5 + $0x84] sm:$0xf]
      %v1013 = vld [vmem:[%s5 + $0x88] sm:$0xf]
      %v1014 = vld [vmem:[%s5 + $0x8c] sm:$0xf]
      %v1015 = vld [vmem:[%s5 + $0x90] sm:$0xf]
      %v1016 = vld [vmem:[%s5 + $0x94] sm:$0xf]
      %v1017 = vld [vmem:[%s5 + $0x98] sm:$0xf]
      %v1018 = vld [vmem:[%s5 + $0x9c] sm:$0xf]
      %v1019 = vld [vmem:[%s5 + $0xa0] sm:$0xf]
      %v1020 = vld [vmem:[%s5 + $0xa4] sm:$0xf]
      %v1021 = vld [vmem:[%s5 + $0xa8] sm:$0xf]
      %v1022 = vld [vmem:[%s5 + $0xac] sm:$0xf]
      %v1023 = vld [vmem:[%s5 + $0xb0] sm:$0xf]
      %v1024 = vld [vmem:[%s5 + $0xb4] sm:$0xf]
      %v1025 = vld [vmem:[%s5 + $0xb8] sm:$0xf]
      %v1026 = vld [vmem:[%s5 + $0xbc] sm:$0xf]
      %v1027 = vld [vmem:[%s5 + $0xc0] sm:$0xf]
      %v1028 = vld [vmem:[%s5 + $0xc4] sm:$0xf]
      %v1029 = vld [vmem:[%s5 + $0xc8] sm:$0xf]
      %v1030 = vld [vmem:[%s5 + $0xcc] sm:$0xf]
      %v1031 = vld [vmem:[%s5 + $0xd0] sm:$0xf]
      %v1032 = vld [vmem:[%s5 + $0xd4] sm:$0xf]
      %v1033 = vld [vmem:[%s5 + $0xd8] sm:$0xf]
      %v1034 = vld [vmem:[%s5 + $0xdc] sm:$0xf]
      %v1035 = vld [vmem:[%s6] sm:$0x1]
      %v1037 = vlaneseq
      %v1038 = vshrl.u32 %v1037, 7
      %v1039 = vsub.s32 0, %v1038
      %v1040 = vrot.slane %v1035, %v1039
      %v1098 = vunpack.c.l.b16 %v979
      %v1099 = vunpack.c.l.b16 %v980
      %v1100 = vunpack.c.l.b16 %v981
      %v1101 = vunpack.c.l.b16 %v982
      %v1102 = vunpack.c.l.b16 %v983
      %v1103 = vunpack.c.l.b16 %v984
      %v1104 = vunpack.c.l.b16 %v985
      %v1105 = vunpack.c.l.b16 %v986
      %v1106 = vunpack.c.l.b16 %v987
      %v1107 = vunpack.c.l.b16 %v988
      %v1108 = vunpack.c.l.b16 %v989
      %v1109 = vunpack.c.l.b16 %v990
      %v1110 = vunpack.c.l.b16 %v991
      %v1111 = vunpack.c.l.b16 %v992
      %v1112 = vunpack.c.l.b16 %v993
      %v1113 = vunpack.c.l.b16 %v994
      %v1114 = vunpack.c.l.b16 %v995
      %v1115 = vunpack.c.l.b16 %v996
      %v1116 = vunpack.c.l.b16 %v997
      %v1117 = vunpack.c.l.b16 %v998
      %v1118 = vunpack.c.l.b16 %v999
      %v1119 = vunpack.c.l.b16 %v1000
      %v1120 = vunpack.c.l.b16 %v1001
      %v1121 = vunpack.c.l.b16 %v1002
      %v1122 = vunpack.c.l.b16 %v1003
      %v1123 = vunpack.c.l.b16 %v1004
      %v1124 = vunpack.c.l.b16 %v1005
      %v1125 = vunpack.c.l.b16 %v1006
      %v1126 = vunpack.c.l.b16 %v1007
      %v1127 = vunpack.c.l.b16 %v1008
      %v1128 = vunpack.c.l.b16 %v1009
      %v1129 = vunpack.c.l.b16 %v1010
      %v1130 = vunpack.c.l.b16 %v1011
      %v1131 = vunpack.c.l.b16 %v1012
      %v1132 = vunpack.c.l.b16 %v1013
      %v1133 = vunpack.c.l.b16 %v1014
      %v1134 = vunpack.c.l.b16 %v1015
      %v1135 = vunpack.c.l.b16 %v1016
      %v1136 = vunpack.c.l.b16 %v1017
      %v1137 = vunpack.c.l.b16 %v1018
      %v1138 = vunpack.c.l.b16 %v1019
      %v1139 = vunpack.c.l.b16 %v1020
      %v1140 = vunpack.c.l.b16 %v1021
      %v1141 = vunpack.c.l.b16 %v1022
      %v1142 = vunpack.c.l.b16 %v1023
      %v1143 = vunpack.c.l.b16 %v1024
      %v1144 = vunpack.c.l.b16 %v1025
      %v1145 = vunpack.c.l.b16 %v1026
      %v1146 = vunpack.c.l.b16 %v1027
      %v1147 = vunpack.c.l.b16 %v1028
      %v1148 = vunpack.c.l.b16 %v1029
      %v1149 = vunpack.c.l.b16 %v1030
      %v1150 = vunpack.c.l.b16 %v1031
      %v1151 = vunpack.c.l.b16 %v1032
      %v1152 = vunpack.c.l.b16 %v1033
      %v1153 = vunpack.c.l.b16 %v1034
      %v1154 = vpack.c.b16 %v1099, %v1098
      %v1155 = vpack.c.b16 %v1101, %v1100
      %v1156 = vpack.c.b16 %v1103, %v1102
      %v1157 = vpack.c.b16 %v1105, %v1104
      %v1158 = vpack.c.b16 %v1107, %v1106
      %v1159 = vpack.c.b16 %v1109, %v1108
      %v1160 = vpack.c.b16 %v1111, %v1110
      %v1161 = vpack.c.b16 %v1113, %v1112
      %v1162 = vpack.c.b16 %v1115, %v1114
      %v1163 = vpack.c.b16 %v1117, %v1116
      %v1164 = vpack.c.b16 %v1119, %v1118
      %v1165 = vpack.c.b16 %v1121, %v1120
      %v1166 = vpack.c.b16 %v1123, %v1122
      %v1167 = vpack.c.b16 %v1125, %v1124
      %v1168 = vpack.c.b16 %v1127, %v1126
      %v1169 = vpack.c.b16 %v1129, %v1128
      %v1170 = vpack.c.b16 %v1131, %v1130
      %v1171 = vpack.c.b16 %v1133, %v1132
      %v1172 = vpack.c.b16 %v1135, %v1134
      %v1173 = vpack.c.b16 %v1137, %v1136
      %v1174 = vpack.c.b16 %v1139, %v1138
      %v1175 = vpack.c.b16 %v1141, %v1140
      %v1176 = vpack.c.b16 %v1143, %v1142
      %v1177 = vpack.c.b16 %v1145, %v1144
      %v1178 = vpack.c.b16 %v1147, %v1146
      %v1179 = vpack.c.b16 %v1149, %v1148
      %v1180 = vpack.c.b16 %v1151, %v1150
      %v1181 = vpack.c.b16 %v1153, %v1152
      %v1211 = vsel %vm712, %v978, 0
      %1213 = vmatprep.subr.bf16.mxu0 0
      %1214 = vmatpush1.bf16.msra.mxu0 %v1161
      %1215 = vmatprep.subr.bf16.mxu0 0
      %1216 = vmatpush1.bf16.msra.mxu0 %v1160
      %1217 = vmatprep.subr.bf16.mxu0 0
      %1218 = vmatpush1.bf16.msra.mxu0 %v1159
      %1219 = vmatprep.subr.bf16.mxu0 0
      %1220 = vmatpush1.bf16.msra.mxu0 %v1158
      %1221 = vmatprep.subr.bf16.mxu0 0
      %1222 = vmatpush1.bf16.msra.mxu0 %v1157
      %1223 = vmatprep.subr.bf16.mxu0 0
      %1224 = vmatpush1.bf16.msra.mxu0 %v1156
      %1225 = vmatprep.subr.bf16.mxu0 0
      %1226 = vmatpush1.bf16.msra.mxu0 %v1155
      %1227 = vmatprep.subr.bf16.mxu0 0
      %1228 = vmatpush1.bf16.msra.mxu0 %v1154
      %1229 = vmatprep.subr.bf16.mxu0 0
      %1230 = vmatpush2.bf16.msra.mxu0 %v1169
      %1231 = vmatprep.subr.bf16.mxu0 0
      %1232 = vmatpush2.bf16.msra.mxu0 %v1168
      %1233 = vmatprep.subr.bf16.mxu0 0
      %1234 = vmatpush2.bf16.msra.mxu0 %v1167
      %1235 = vmatprep.subr.bf16.mxu0 0
      %1236 = vmatpush2.bf16.msra.mxu0 %v1166
      %1237 = vmatprep.subr.bf16.mxu0 0
      %1238 = vmatpush2.bf16.msra.mxu0 %v1165
      %1239 = vmatprep.subr.bf16.mxu0 0
      %1240 = vmatpush2.bf16.msra.mxu0 %v1164
      %1241 = vmatprep.subr.bf16.mxu0 0
      %1242 = vmatpush2.bf16.msra.mxu0 %v1163
      %1243 = vmatprep.subr.bf16.mxu0 0
      %1244 = vmatpush2.bf16.msra.mxu0 %v1162
      %1245 = vmatprep.mubr.bf16.mxu0 %v976
      %1246 = vmatmul.mubr.bf16.gmra.mxu0 %v975
      %v1247 = vpop.f32.mrf.mxu0
      %v1248 = vadd.f32 %v1040, %v1247
      %v1249 = vpop.f32.mrf.mxu0
      %v1250 = vpop.f32.mrf.mxu0
      %v1251 = vadd.f32 %v1040, %v1250
      %v1252 = vpop.f32.mrf.mxu0
      %1253 = vdwg.mxu0
      %1254 = vmatprep.subr.bf16.mxu0 0
      %1255 = vmatpush1.bf16.msra.mxu0 %v1177
      %1256 = vmatprep.subr.bf16.mxu0 0
      %1257 = vmatpush1.bf16.msra.mxu0 %v1176
      %1258 = vmatprep.subr.bf16.mxu0 0
      %1259 = vmatpush1.bf16.msra.mxu0 %v1175
      %1260 = vmatprep.subr.bf16.mxu0 0
      %1261 = vmatpush1.bf16.msra.mxu0 %v1174
      %1262 = vmatprep.subr.bf16.mxu0 0
      %1263 = vmatpush1.bf16.msra.mxu0 %v1173
      %1264 = vmatprep.subr.bf16.mxu0 0
      %1265 = vmatpush1.bf16.msra.mxu0 %v1172
      %1266 = vmatprep.subr.bf16.mxu0 0
      %1267 = vmatpush1.bf16.msra.mxu0 %v1171
      %1268 = vmatprep.subr.bf16.mxu0 0
      %1269 = vmatpush1.bf16.msra.mxu0 %v1170
      %1270 = vmatprep.subr.bf16.mxu0 0
      %1271 = vmatpush2.bf16.msra.mxu0 0
      %1272 = vmatprep.subr.bf16.mxu0 0
      %1273 = vmatpush2.bf16.msra.mxu0 0
      %1274 = vmatprep.subr.bf16.mxu0 0
      %1275 = vmatpush2.bf16.msra.mxu0 0
      %1276 = vmatprep.subr.bf16.mxu0 0
      %1277 = vmatpush2.bf16.msra.mxu0 0
      %1278 = vmatprep.subr.bf16.mxu0 0
      %1279 = vmatpush2.bf16.msra.mxu0 %v1181
      %1280 = vmatprep.subr.bf16.mxu0 0
      %1281 = vmatpush2.bf16.msra.mxu0 %v1180
      %1282 = vmatprep.subr.bf16.mxu0 0
      %1283 = vmatpush2.bf16.msra.mxu0 %v1179
      %1284 = vmatprep.subr.bf16.mxu0 0
      %1285 = vmatpush2.bf16.msra.mxu0 %v1178
      %1286 = vmatprep.mubr.bf16.mxu0 %v1211
      %1287 = vmatmul.mubr.bf16.gmra.mxu0 %v977
      %v1288 = vpop.f32.mrf.mxu0
      %v1289 = vadd.f32 %v1248, %v1288
      %v1290 = vpop.f32.mrf.mxu0
      %v1291 = vpop.f32.mrf.mxu0
      %v1292 = vadd.f32 %v1251, %v1291
      %v1293 = vpop.f32.mrf.mxu0
      %1294 = vdwg.mxu0
      %v1295 = vmax.f32 %v1289, 0.0
      %v1296 = vmax.f32 %v1292, 0.0
      %1297 = vst [vmem:[#allocation4] sm:$0xff] %v1295
      %1298 = vst [vmem:[#allocation4 + $0x8] sm:$0xff] %v1296
      %v1299 = vld [vmem:[#allocation4] ss:$2 sm:$0xff]
      %s1300 = scalar_lea.vmem [#allocation4], 1
      %v1301 = vld [vmem:[%s1300] ss:$2 sm:$0xff]
      %v1302 = vmax.f32 %v1299, %v1301
      %1303 = vst [vmem:[#allocation7] sm:$0xff] 0.0
      %1304 = vst [vmem:[#allocation7 + $0x8] sm:$0x3f] 0.0
      %1305 = vst [vmem:[#allocation7 + $0x3] sm:$0xff] %v1302
      %v1306 = vld [vmem:[#allocation7] sm:$0xff]
      %v1307 = vld [vmem:[#allocation7 + $0x1] sm:$0xff]
      %v1308 = vld [vmem:[#allocation7 + $0x2] sm:$0xff]
      %v1309 = vld [vmem:[#allocation7 + $0x3] sm:$0xff]
      %v1310 = vld [vmem:[#allocation7 + $0x4] sm:$0xff]
      %v1311 = vld [vmem:[#allocation7 + $0x5] sm:$0xff]
      %v1312 = vld [vmem:[#allocation7 + $0x6] sm:$0xff]
      %v1313 = vpack.c.bf16 %v1306, %v1306
      %v1314 = vpack.c.bf16 %v1307, %v1307
      %v1315 = vpack.c.bf16 %v1308, %v1308
      %v1316 = vpack.c.bf16 %v1309, %v1309
      %v1317 = vpack.c.bf16 %v1310, %v1310
      %v1318 = vpack.c.bf16 %v1311, %v1311
      %v1319 = vpack.c.bf16 %v1312, %v1312
      %v1320 = vld [vmem:[%s7] sm:$0xff]
      %v1321 = vld [vmem:[%s7 + $0x8] sm:$0xff]
      %v1322 = vld [vmem:[%s7 + $0x10] sm:$0xff]
      %v1323 = vld [vmem:[%s7 + $0x18] sm:$0xff]
      %v1324 = vld [vmem:[%s7 + $0x20] sm:$0xff]
      %v1325 = vld [vmem:[%s7 + $0x28] sm:$0xff]
      %v1326 = vld [vmem:[%s7 + $0x30] sm:$0xff]
      %v1327 = vld [vmem:[%s7 + $0x38] sm:$0xff]
      %v1328 = vld [vmem:[%s7 + $0x40] sm:$0xff]
      %v1329 = vld [vmem:[%s7 + $0x48] sm:$0xff]
      %v1330 = vld [vmem:[%s7 + $0x50] sm:$0xff]
      %v1331 = vld [vmem:[%s7 + $0x58] sm:$0xff]
      %v1332 = vld [vmem:[%s7 + $0x60] sm:$0xff]
      %v1333 = vld [vmem:[%s7 + $0x68] sm:$0xff]
      %v1334 = vld [vmem:[%s7 + $0x70] sm:$0xff]
      %v1335 = vld [vmem:[%s7 + $0x78] sm:$0xff]
      %v1336 = vld [vmem:[%s7 + $0x80] sm:$0xff]
      %v1337 = vld [vmem:[%s7 + $0x88] sm:$0xff]
      %v1338 = vld [vmem:[%s7 + $0x90] sm:$0xff]
      %v1339 = vld [vmem:[%s7 + $0x98] sm:$0xff]
      %v1340 = vld [vmem:[%s7 + $0xa0] sm:$0xff]
      %v1341 = vld [vmem:[%s7 + $0xa8] sm:$0xff]
      %v1342 = vld [vmem:[%s7 + $0xb0] sm:$0xff]
      %v1343 = vld [vmem:[%s7 + $0xb8] sm:$0xff]
      %v1344 = vld [vmem:[%s7 + $0xc0] sm:$0xff]
      %v1345 = vld [vmem:[%s7 + $0xc8] sm:$0xff]
      %v1346 = vld [vmem:[%s7 + $0xd0] sm:$0xff]
      %v1347 = vld [vmem:[%s7 + $0xd8] sm:$0xff]
      %v1348 = vld [vmem:[%s7 + $0xe0] sm:$0xff]
      %v1349 = vld [vmem:[%s7 + $0xe8] sm:$0xff]
      %v1350 = vld [vmem:[%s7 + $0xf0] sm:$0xff]
      %v1351 = vld [vmem:[%s7 + $0xf8] sm:$0xff]
      %v1352 = vld [vmem:[%s7 + $0x100] sm:$0xff]
      %v1353 = vld [vmem:[%s7 + $0x108] sm:$0xff]
      %v1354 = vld [vmem:[%s7 + $0x110] sm:$0xff]
      %v1355 = vld [vmem:[%s7 + $0x118] sm:$0xff]
      %v1356 = vld [vmem:[%s7 + $0x120] sm:$0xff]
      %v1357 = vld [vmem:[%s7 + $0x128] sm:$0xff]
      %v1358 = vld [vmem:[%s7 + $0x130] sm:$0xff]
      %v1359 = vld [vmem:[%s7 + $0x138] sm:$0xff]
      %v1360 = vld [vmem:[%s7 + $0x140] sm:$0xff]
      %v1361 = vld [vmem:[%s7 + $0x148] sm:$0xff]
      %v1362 = vld [vmem:[%s7 + $0x150] sm:$0xff]
      %v1363 = vld [vmem:[%s7 + $0x158] sm:$0xff]
      %v1364 = vld [vmem:[%s7 + $0x160] sm:$0xff]
      %v1365 = vld [vmem:[%s7 + $0x168] sm:$0xff]
      %v1366 = vld [vmem:[%s7 + $0x170] sm:$0xff]
      %v1367 = vld [vmem:[%s7 + $0x178] sm:$0xff]
      %v1368 = vld [vmem:[%s7 + $0x180] sm:$0xff]
      %v1369 = vld [vmem:[%s7 + $0x188] sm:$0xff]
      %v1370 = vld [vmem:[%s7 + $0x190] sm:$0xff]
      %v1371 = vld [vmem:[%s7 + $0x198] sm:$0xff]
      %v1372 = vld [vmem:[%s7 + $0x1a0] sm:$0xff]
      %v1373 = vld [vmem:[%s7 + $0x1a8] sm:$0xff]
      %v1374 = vld [vmem:[%s7 + $0x1b0] sm:$0xff]
      %v1375 = vld [vmem:[%s7 + $0x1b8] sm:$0xff]
      %v1376 = vld [vmem:[%s7 + $0x1c0] sm:$0xff]
      %v1377 = vld [vmem:[%s7 + $0x1c8] sm:$0xff]
      %v1378 = vld [vmem:[%s7 + $0x1d0] sm:$0xff]
      %v1379 = vld [vmem:[%s7 + $0x1d8] sm:$0xff]
      %v1380 = vld [vmem:[%s7 + $0x1e0] sm:$0xff]
      %v1381 = vld [vmem:[%s7 + $0x1e8] sm:$0xff]
      %v1382 = vld [vmem:[%s7 + $0x1f0] sm:$0xff]
      %v1383 = vld [vmem:[%s7 + $0x1f8] sm:$0xff]
      %v1384 = vld [vmem:[%s7 + $0x200] sm:$0xff]
      %v1385 = vld [vmem:[%s7 + $0x208] sm:$0xff]
      %v1386 = vld [vmem:[%s7 + $0x210] sm:$0xff]
      %v1387 = vld [vmem:[%s7 + $0x218] sm:$0xff]
      %v1388 = vld [vmem:[%s7 + $0x220] sm:$0xff]
      %v1389 = vld [vmem:[%s7 + $0x228] sm:$0xff]
      %v1390 = vld [vmem:[%s7 + $0x230] sm:$0xff]
      %v1391 = vld [vmem:[%s7 + $0x238] sm:$0xff]
      %v1392 = vld [vmem:[%s7 + $0x240] sm:$0xff]
      %v1393 = vld [vmem:[%s7 + $0x248] sm:$0xff]
      %v1394 = vld [vmem:[%s7 + $0x250] sm:$0xff]
      %v1395 = vld [vmem:[%s7 + $0x258] sm:$0xff]
      %v1396 = vld [vmem:[%s7 + $0x260] sm:$0xff]
      %v1397 = vld [vmem:[%s7 + $0x268] sm:$0xff]
      %v1398 = vld [vmem:[%s7 + $0x270] sm:$0xff]
      %v1399 = vld [vmem:[%s7 + $0x278] sm:$0xff]
      %v1400 = vld [vmem:[%s7 + $0x280] sm:$0xff]
      %v1401 = vld [vmem:[%s7 + $0x288] sm:$0xff]
      %v1402 = vld [vmem:[%s7 + $0x290] sm:$0xff]
      %v1403 = vld [vmem:[%s7 + $0x298] sm:$0xff]
      %v1404 = vld [vmem:[%s7 + $0x2a0] sm:$0xff]
      %v1405 = vld [vmem:[%s7 + $0x2a8] sm:$0xff]
      %v1406 = vld [vmem:[%s7 + $0x2b0] sm:$0xff]
      %v1407 = vld [vmem:[%s7 + $0x2b8] sm:$0xff]
      %v1408 = vld [vmem:[%s7 + $0x2c0] sm:$0xff]
      %v1409 = vld [vmem:[%s7 + $0x2c8] sm:$0xff]
      %v1410 = vld [vmem:[%s7 + $0x2d0] sm:$0xff]
      %v1411 = vld [vmem:[%s7 + $0x2d8] sm:$0xff]
      %v1412 = vld [vmem:[%s7 + $0x2e0] sm:$0xff]
      %v1413 = vld [vmem:[%s7 + $0x2e8] sm:$0xff]
      %v1414 = vld [vmem:[%s7 + $0x2f0] sm:$0xff]
      %v1415 = vld [vmem:[%s7 + $0x2f8] sm:$0xff]
      %v1416 = vld [vmem:[%s7 + $0x300] sm:$0xff]
      %v1417 = vld [vmem:[%s7 + $0x308] sm:$0xff]
      %v1418 = vld [vmem:[%s7 + $0x310] sm:$0xff]
      %v1419 = vld [vmem:[%s7 + $0x318] sm:$0xff]
      %v1420 = vld [vmem:[%s7 + $0x320] sm:$0xff]
      %v1421 = vld [vmem:[%s7 + $0x328] sm:$0xff]
      %v1422 = vld [vmem:[%s7 + $0x330] sm:$0xff]
      %v1423 = vld [vmem:[%s7 + $0x338] sm:$0xff]
      %v1424 = vld [vmem:[%s7 + $0x340] sm:$0xff]
      %v1425 = vld [vmem:[%s7 + $0x348] sm:$0xff]
      %v1426 = vld [vmem:[%s7 + $0x350] sm:$0xff]
      %v1427 = vld [vmem:[%s7 + $0x358] sm:$0xff]
      %v1428 = vld [vmem:[%s7 + $0x360] sm:$0xff]
      %v1429 = vld [vmem:[%s7 + $0x368] sm:$0xff]
      %v1430 = vld [vmem:[%s7 + $0x370] sm:$0xff]
      %v1431 = vld [vmem:[%s7 + $0x378] sm:$0xff]
      %v1432 = vld [vmem:[%s8] sm:$0x3]
      %v1434 = vlaneseq
      %v1435 = vshrl.u32 %v1434, 7
      %v1436 = vsub.s32 0, %v1435
      %v1437 = vrot.slane %v1432, %v1436
      %v1438 = vlaneseq
      %v1439 = vshrl.u32 %v1438, 7
      %v1440 = vsub.s32 1, %v1439
      %v1441 = vrot.slane %v1432, %v1440
      %v1556 = vunpack.c.l.b16 %v1320
      %v1557 = vunpack.c.h.b16 %v1320
      %v1558 = vunpack.c.l.b16 %v1321
      %v1559 = vunpack.c.h.b16 %v1321
      %v1560 = vunpack.c.l.b16 %v1322
      %v1561 = vunpack.c.h.b16 %v1322
      %v1562 = vunpack.c.l.b16 %v1323
      %v1563 = vunpack.c.h.b16 %v1323
      %v1564 = vunpack.c.l.b16 %v1324
      %v1565 = vunpack.c.h.b16 %v1324
      %v1566 = vunpack.c.l.b16 %v1325
      %v1567 = vunpack.c.h.b16 %v1325
      %v1568 = vunpack.c.l.b16 %v1326
      %v1569 = vunpack.c.h.b16 %v1326
      %v1570 = vunpack.c.l.b16 %v1327
      %v1571 = vunpack.c.h.b16 %v1327
      %v1572 = vunpack.c.l.b16 %v1328
      %v1573 = vunpack.c.h.b16 %v1328
      %v1574 = vunpack.c.l.b16 %v1329
      %v1575 = vunpack.c.h.b16 %v1329
      %v1576 = vunpack.c.l.b16 %v1330
      %v1577 = vunpack.c.h.b16 %v1330
      %v1578 = vunpack.c.l.b16 %v1331
      %v1579 = vunpack.c.h.b16 %v1331
      %v1580 = vunpack.c.l.b16 %v1332
      %v1581 = vunpack.c.h.b16 %v1332
      %v1582 = vunpack.c.l.b16 %v1333
      %v1583 = vunpack.c.h.b16 %v1333
      %v1584 = vunpack.c.l.b16 %v1334
      %v1585 = vunpack.c.h.b16 %v1334
      %v1586 = vunpack.c.l.b16 %v1335
      %v1587 = vunpack.c.h.b16 %v1335
      %v1588 = vunpack.c.l.b16 %v1336
      %v1589 = vunpack.c.h.b16 %v1336
      %v1590 = vunpack.c.l.b16 %v1337
      %v1591 = vunpack.c.h.b16 %v1337
      %v1592 = vunpack.c.l.b16 %v1338
      %v1593 = vunpack.c.h.b16 %v1338
      %v1594 = vunpack.c.l.b16 %v1339
      %v1595 = vunpack.c.h.b16 %v1339
      %v1596 = vunpack.c.l.b16 %v1340
      %v1597 = vunpack.c.h.b16 %v1340
      %v1598 = vunpack.c.l.b16 %v1341
      %v1599 = vunpack.c.h.b16 %v1341
      %v1600 = vunpack.c.l.b16 %v1342
      %v1601 = vunpack.c.h.b16 %v1342
      %v1602 = vunpack.c.l.b16 %v1343
      %v1603 = vunpack.c.h.b16 %v1343
      %v1604 = vunpack.c.l.b16 %v1344
      %v1605 = vunpack.c.h.b16 %v1344
      %v1606 = vunpack.c.l.b16 %v1345
      %v1607 = vunpack.c.h.b16 %v1345
      %v1608 = vunpack.c.l.b16 %v1346
      %v1609 = vunpack.c.h.b16 %v1346
      %v1610 = vunpack.c.l.b16 %v1347
      %v1611 = vunpack.c.h.b16 %v1347
      %v1612 = vunpack.c.l.b16 %v1348
      %v1613 = vunpack.c.h.b16 %v1348
      %v1614 = vunpack.c.l.b16 %v1349
      %v1615 = vunpack.c.h.b16 %v1349
      %v1616 = vunpack.c.l.b16 %v1350
      %v1617 = vunpack.c.h.b16 %v1350
      %v1618 = vunpack.c.l.b16 %v1351
      %v1619 = vunpack.c.h.b16 %v1351
      %v1620 = vunpack.c.l.b16 %v1352
      %v1621 = vunpack.c.h.b16 %v1352
      %v1622 = vunpack.c.l.b16 %v1353
      %v1623 = vunpack.c.h.b16 %v1353
      %v1624 = vunpack.c.l.b16 %v1354
      %v1625 = vunpack.c.h.b16 %v1354
      %v1626 = vunpack.c.l.b16 %v1355
      %v1627 = vunpack.c.h.b16 %v1355
      %v1628 = vunpack.c.l.b16 %v1356
      %v1629 = vunpack.c.h.b16 %v1356
      %v1630 = vunpack.c.l.b16 %v1357
      %v1631 = vunpack.c.h.b16 %v1357
      %v1632 = vunpack.c.l.b16 %v1358
      %v1633 = vunpack.c.h.b16 %v1358
      %v1634 = vunpack.c.l.b16 %v1359
      %v1635 = vunpack.c.h.b16 %v1359
      %v1636 = vunpack.c.l.b16 %v1360
      %v1637 = vunpack.c.h.b16 %v1360
      %v1638 = vunpack.c.l.b16 %v1361
      %v1639 = vunpack.c.h.b16 %v1361
      %v1640 = vunpack.c.l.b16 %v1362
      %v1641 = vunpack.c.h.b16 %v1362
      %v1642 = vunpack.c.l.b16 %v1363
      %v1643 = vunpack.c.h.b16 %v1363
      %v1644 = vunpack.c.l.b16 %v1364
      %v1645 = vunpack.c.h.b16 %v1364
      %v1646 = vunpack.c.l.b16 %v1365
      %v1647 = vunpack.c.h.b16 %v1365
      %v1648 = vunpack.c.l.b16 %v1366
      %v1649 = vunpack.c.h.b16 %v1366
      %v1650 = vunpack.c.l.b16 %v1367
      %v1651 = vunpack.c.h.b16 %v1367
      %v1652 = vunpack.c.l.b16 %v1368
      %v1653 = vunpack.c.h.b16 %v1368
      %v1654 = vunpack.c.l.b16 %v1369
      %v1655 = vunpack.c.h.b16 %v1369
      %v1656 = vunpack.c.l.b16 %v1370
      %v1657 = vunpack.c.h.b16 %v1370
      %v1658 = vunpack.c.l.b16 %v1371
      %v1659 = vunpack.c.h.b16 %v1371
      %v1660 = vunpack.c.l.b16 %v1372
      %v1661 = vunpack.c.h.b16 %v1372
      %v1662 = vunpack.c.l.b16 %v1373
      %v1663 = vunpack.c.h.b16 %v1373
      %v1664 = vunpack.c.l.b16 %v1374
      %v1665 = vunpack.c.h.b16 %v1374
      %v1666 = vunpack.c.l.b16 %v1375
      %v1667 = vunpack.c.h.b16 %v1375
      %v1668 = vunpack.c.l.b16 %v1376
      %v1669 = vunpack.c.h.b16 %v1376
      %v1670 = vunpack.c.l.b16 %v1377
      %v1671 = vunpack.c.h.b16 %v1377
      %v1672 = vunpack.c.l.b16 %v1378
      %v1673 = vunpack.c.h.b16 %v1378
      %v1674 = vunpack.c.l.b16 %v1379
      %v1675 = vunpack.c.h.b16 %v1379
      %v1676 = vunpack.c.l.b16 %v1380
      %v1677 = vunpack.c.h.b16 %v1380
      %v1678 = vunpack.c.l.b16 %v1381
      %v1679 = vunpack.c.h.b16 %v1381
      %v1680 = vunpack.c.l.b16 %v1382
      %v1681 = vunpack.c.h.b16 %v1382
      %v1682 = vunpack.c.l.b16 %v1383
      %v1683 = vunpack.c.h.b16 %v1383
      %v1684 = vunpack.c.l.b16 %v1384
      %v1685 = vunpack.c.h.b16 %v1384
      %v1686 = vunpack.c.l.b16 %v1385
      %v1687 = vunpack.c.h.b16 %v1385
      %v1688 = vunpack.c.l.b16 %v1386
      %v1689 = vunpack.c.h.b16 %v1386
      %v1690 = vunpack.c.l.b16 %v1387
      %v1691 = vunpack.c.h.b16 %v1387
      %v1692 = vunpack.c.l.b16 %v1388
      %v1693 = vunpack.c.h.b16 %v1388
      %v1694 = vunpack.c.l.b16 %v1389
      %v1695 = vunpack.c.h.b16 %v1389
      %v1696 = vunpack.c.l.b16 %v1390
      %v1697 = vunpack.c.h.b16 %v1390
      %v1698 = vunpack.c.l.b16 %v1391
      %v1699 = vunpack.c.h.b16 %v1391
      %v1700 = vunpack.c.l.b16 %v1392
      %v1701 = vunpack.c.h.b16 %v1392
      %v1702 = vunpack.c.l.b16 %v1393
      %v1703 = vunpack.c.h.b16 %v1393
      %v1704 = vunpack.c.l.b16 %v1394
      %v1705 = vunpack.c.h.b16 %v1394
      %v1706 = vunpack.c.l.b16 %v1395
      %v1707 = vunpack.c.h.b16 %v1395
      %v1708 = vunpack.c.l.b16 %v1396
      %v1709 = vunpack.c.h.b16 %v1396
      %v1710 = vunpack.c.l.b16 %v1397
      %v1711 = vunpack.c.h.b16 %v1397
      %v1712 = vunpack.c.l.b16 %v1398
      %v1713 = vunpack.c.h.b16 %v1398
      %v1714 = vunpack.c.l.b16 %v1399
      %v1715 = vunpack.c.h.b16 %v1399
      %v1716 = vunpack.c.l.b16 %v1400
      %v1717 = vunpack.c.h.b16 %v1400
      %v1718 = vunpack.c.l.b16 %v1401
      %v1719 = vunpack.c.h.b16 %v1401
      %v1720 = vunpack.c.l.b16 %v1402
      %v1721 = vunpack.c.h.b16 %v1402
      %v1722 = vunpack.c.l.b16 %v1403
      %v1723 = vunpack.c.h.b16 %v1403
      %v1724 = vunpack.c.l.b16 %v1404
      %v1725 = vunpack.c.h.b16 %v1404
      %v1726 = vunpack.c.l.b16 %v1405
      %v1727 = vunpack.c.h.b16 %v1405
      %v1728 = vunpack.c.l.b16 %v1406
      %v1729 = vunpack.c.h.b16 %v1406
      %v1730 = vunpack.c.l.b16 %v1407
      %v1731 = vunpack.c.h.b16 %v1407
      %v1732 = vunpack.c.l.b16 %v1408
      %v1733 = vunpack.c.h.b16 %v1408
      %v1734 = vunpack.c.l.b16 %v1409
      %v1735 = vunpack.c.h.b16 %v1409
      %v1736 = vunpack.c.l.b16 %v1410
      %v1737 = vunpack.c.h.b16 %v1410
      %v1738 = vunpack.c.l.b16 %v1411
      %v1739 = vunpack.c.h.b16 %v1411
      %v1740 = vunpack.c.l.b16 %v1412
      %v1741 = vunpack.c.h.b16 %v1412
      %v1742 = vunpack.c.l.b16 %v1413
      %v1743 = vunpack.c.h.b16 %v1413
      %v1744 = vunpack.c.l.b16 %v1414
      %v1745 = vunpack.c.h.b16 %v1414
      %v1746 = vunpack.c.l.b16 %v1415
      %v1747 = vunpack.c.h.b16 %v1415
      %v1748 = vunpack.c.l.b16 %v1416
      %v1749 = vunpack.c.h.b16 %v1416
      %v1750 = vunpack.c.l.b16 %v1417
      %v1751 = vunpack.c.h.b16 %v1417
      %v1752 = vunpack.c.l.b16 %v1418
      %v1753 = vunpack.c.h.b16 %v1418
      %v1754 = vunpack.c.l.b16 %v1419
      %v1755 = vunpack.c.h.b16 %v1419
      %v1756 = vunpack.c.l.b16 %v1420
      %v1757 = vunpack.c.h.b16 %v1420
      %v1758 = vunpack.c.l.b16 %v1421
      %v1759 = vunpack.c.h.b16 %v1421
      %v1760 = vunpack.c.l.b16 %v1422
      %v1761 = vunpack.c.h.b16 %v1422
      %v1762 = vunpack.c.l.b16 %v1423
      %v1763 = vunpack.c.h.b16 %v1423
      %v1764 = vunpack.c.l.b16 %v1424
      %v1765 = vunpack.c.h.b16 %v1424
      %v1766 = vunpack.c.l.b16 %v1425
      %v1767 = vunpack.c.h.b16 %v1425
      %v1768 = vunpack.c.l.b16 %v1426
      %v1769 = vunpack.c.h.b16 %v1426
      %v1770 = vunpack.c.l.b16 %v1427
      %v1771 = vunpack.c.h.b16 %v1427
      %v1772 = vunpack.c.l.b16 %v1428
      %v1773 = vunpack.c.h.b16 %v1428
      %v1774 = vunpack.c.l.b16 %v1429
      %v1775 = vunpack.c.h.b16 %v1429
      %v1776 = vunpack.c.l.b16 %v1430
      %v1777 = vunpack.c.h.b16 %v1430
      %v1778 = vunpack.c.l.b16 %v1431
      %v1779 = vunpack.c.h.b16 %v1431
      %v1780 = vpack.c.b16 %v1558, %v1556
      %v1781 = vpack.c.b16 %v1559, %v1557
      %v1782 = vpack.c.b16 %v1562, %v1560
      %v1783 = vpack.c.b16 %v1563, %v1561
      %v1784 = vpack.c.b16 %v1566, %v1564
      %v1785 = vpack.c.b16 %v1567, %v1565
      %v1786 = vpack.c.b16 %v1570, %v1568
      %v1787 = vpack.c.b16 %v1571, %v1569
      %v1788 = vpack.c.b16 %v1574, %v1572
      %v1789 = vpack.c.b16 %v1575, %v1573
      %v1790 = vpack.c.b16 %v1578, %v1576
      %v1791 = vpack.c.b16 %v1579, %v1577
      %v1792 = vpack.c.b16 %v1582, %v1580
      %v1793 = vpack.c.b16 %v1583, %v1581
      %v1794 = vpack.c.b16 %v1586, %v1584
      %v1795 = vpack.c.b16 %v1587, %v1585
      %v1796 = vpack.c.b16 %v1590, %v1588
      %v1797 = vpack.c.b16 %v1591, %v1589
      %v1798 = vpack.c.b16 %v1594, %v1592
      %v1799 = vpack.c.b16 %v1595, %v1593
      %v1800 = vpack.c.b16 %v1598, %v1596
      %v1801 = vpack.c.b16 %v1599, %v1597
      %v1802 = vpack.c.b16 %v1602, %v1600
      %v1803 = vpack.c.b16 %v1603, %v1601
      %v1804 = vpack.c.b16 %v1606, %v1604
      %v1805 = vpack.c.b16 %v1607, %v1605
      %v1806 = vpack.c.b16 %v1610, %v1608
      %v1807 = vpack.c.b16 %v1611, %v1609
      %v1808 = vpack.c.b16 %v1614, %v1612
      %v1809 = vpack.c.b16 %v1615, %v1613
      %v1810 = vpack.c.b16 %v1618, %v1616
      %v1811 = vpack.c.b16 %v1619, %v1617
      %v1812 = vpack.c.b16 %v1622, %v1620
      %v1813 = vpack.c.b16 %v1623, %v1621
      %v1814 = vpack.c.b16 %v1626, %v1624
      %v1815 = vpack.c.b16 %v1627, %v1625
      %v1816 = vpack.c.b16 %v1630, %v1628
      %v1817 = vpack.c.b16 %v1631, %v1629
      %v1818 = vpack.c.b16 %v1634, %v1632
      %v1819 = vpack.c.b16 %v1635, %v1633
      %v1820 = vpack.c.b16 %v1638, %v1636
      %v1821 = vpack.c.b16 %v1639, %v1637
      %v1822 = vpack.c.b16 %v1642, %v1640
      %v1823 = vpack.c.b16 %v1643, %v1641
      %v1824 = vpack.c.b16 %v1646, %v1644
      %v1825 = vpack.c.b16 %v1647, %v1645
      %v1826 = vpack.c.b16 %v1650, %v1648
      %v1827 = vpack.c.b16 %v1651, %v1649
      %v1828 = vpack.c.b16 %v1654, %v1652
      %v1829 = vpack.c.b16 %v1655, %v1653
      %v1830 = vpack.c.b16 %v1658, %v1656
      %v1831 = vpack.c.b16 %v1659, %v1657
      %v1832 = vpack.c.b16 %v1662, %v1660
      %v1833 = vpack.c.b16 %v1663, %v1661
      %v1834 = vpack.c.b16 %v1666, %v1664
      %v1835 = vpack.c.b16 %v1667, %v1665
      %v1836 = vpack.c.b16 %v1670, %v1668
      %v1837 = vpack.c.b16 %v1671, %v1669
      %v1838 = vpack.c.b16 %v1674, %v1672
      %v1839 = vpack.c.b16 %v1675, %v1673
      %v1840 = vpack.c.b16 %v1678, %v1676
      %v1841 = vpack.c.b16 %v1679, %v1677
      %v1842 = vpack.c.b16 %v1682, %v1680
      %v1843 = vpack.c.b16 %v1683, %v1681
      %v1844 = vpack.c.b16 %v1686, %v1684
      %v1845 = vpack.c.b16 %v1687, %v1685
      %v1846 = vpack.c.b16 %v1690, %v1688
      %v1847 = vpack.c.b16 %v1691, %v1689
      %v1848 = vpack.c.b16 %v1694, %v1692
      %v1849 = vpack.c.b16 %v1695, %v1693
      %v1850 = vpack.c.b16 %v1698, %v1696
      %v1851 = vpack.c.b16 %v1699, %v1697
      %v1852 = vpack.c.b16 %v1702, %v1700
      %v1853 = vpack.c.b16 %v1703, %v1701
      %v1854 = vpack.c.b16 %v1706, %v1704
      %v1855 = vpack.c.b16 %v1707, %v1705
      %v1856 = vpack.c.b16 %v1710, %v1708
      %v1857 = vpack.c.b16 %v1711, %v1709
      %v1858 = vpack.c.b16 %v1714, %v1712
      %v1859 = vpack.c.b16 %v1715, %v1713
      %v1860 = vpack.c.b16 %v1718, %v1716
      %v1861 = vpack.c.b16 %v1719, %v1717
      %v1862 = vpack.c.b16 %v1722, %v1720
      %v1863 = vpack.c.b16 %v1723, %v1721
      %v1864 = vpack.c.b16 %v1726, %v1724
      %v1865 = vpack.c.b16 %v1727, %v1725
      %v1866 = vpack.c.b16 %v1730, %v1728
      %v1867 = vpack.c.b16 %v1731, %v1729
      %v1868 = vpack.c.b16 %v1734, %v1732
      %v1869 = vpack.c.b16 %v1735, %v1733
      %v1870 = vpack.c.b16 %v1738, %v1736
      %v1871 = vpack.c.b16 %v1739, %v1737
      %v1872 = vpack.c.b16 %v1742, %v1740
      %v1873 = vpack.c.b16 %v1743, %v1741
      %v1874 = vpack.c.b16 %v1746, %v1744
      %v1875 = vpack.c.b16 %v1747, %v1745
      %v1876 = vpack.c.b16 %v1750, %v1748
      %v1877 = vpack.c.b16 %v1751, %v1749
      %v1878 = vpack.c.b16 %v1754, %v1752
      %v1879 = vpack.c.b16 %v1755, %v1753
      %v1880 = vpack.c.b16 %v1758, %v1756
      %v1881 = vpack.c.b16 %v1759, %v1757
      %v1882 = vpack.c.b16 %v1762, %v1760
      %v1883 = vpack.c.b16 %v1763, %v1761
      %v1884 = vpack.c.b16 %v1766, %v1764
      %v1885 = vpack.c.b16 %v1767, %v1765
      %v1886 = vpack.c.b16 %v1770, %v1768
      %v1887 = vpack.c.b16 %v1771, %v1769
      %v1888 = vpack.c.b16 %v1774, %v1772
      %v1889 = vpack.c.b16 %v1775, %v1773
      %v1890 = vpack.c.b16 %v1778, %v1776
      %v1891 = vpack.c.b16 %v1779, %v1777
      %2004 = vmatprep.subr.bf16.mxu0 %v1795
      %2005 = vmatpush1.bf16.msra.mxu0 %v1794
      %2006 = vmatprep.subr.bf16.mxu0 %v1793
      %2007 = vmatpush1.bf16.msra.mxu0 %v1792
      %2008 = vmatprep.subr.bf16.mxu0 %v1791
      %2009 = vmatpush1.bf16.msra.mxu0 %v1790
      %2010 = vmatprep.subr.bf16.mxu0 %v1789
      %2011 = vmatpush1.bf16.msra.mxu0 %v1788
      %2012 = vmatprep.subr.bf16.mxu0 %v1787
      %2013 = vmatpush1.bf16.msra.mxu0 %v1786
      %2014 = vmatprep.subr.bf16.mxu0 %v1785
      %2015 = vmatpush1.bf16.msra.mxu0 %v1784
      %2016 = vmatprep.subr.bf16.mxu0 %v1783
      %2017 = vmatpush1.bf16.msra.mxu0 %v1782
      %2018 = vmatprep.subr.bf16.mxu0 %v1781
      %2019 = vmatpush1.bf16.msra.mxu0 %v1780
      %2020 = vmatprep.subr.bf16.mxu0 %v1811
      %2021 = vmatpush2.bf16.msra.mxu0 %v1810
      %2022 = vmatprep.subr.bf16.mxu0 %v1809
      %2023 = vmatpush2.bf16.msra.mxu0 %v1808
      %2024 = vmatprep.subr.bf16.mxu0 %v1807
      %2025 = vmatpush2.bf16.msra.mxu0 %v1806
      %2026 = vmatprep.subr.bf16.mxu0 %v1805
      %2027 = vmatpush2.bf16.msra.mxu0 %v1804
      %2028 = vmatprep.subr.bf16.mxu0 %v1803
      %2029 = vmatpush2.bf16.msra.mxu0 %v1802
      %2030 = vmatprep.subr.bf16.mxu0 %v1801
      %2031 = vmatpush2.bf16.msra.mxu0 %v1800
      %2032 = vmatprep.subr.bf16.mxu0 %v1799
      %2033 = vmatpush2.bf16.msra.mxu0 %v1798
      %2034 = vmatprep.subr.bf16.mxu0 %v1797
      %2035 = vmatpush2.bf16.msra.mxu0 %v1796
      %2036 = vmatprep.mubr.bf16.mxu0 %v1314
      %2037 = vmatmul.mubr.bf16.gmra.mxu0 %v1313
      %v2038 = vpop.f32.mrf.mxu0
      %v2039 = vadd.f32 %v1437, %v2038
      %v2040 = vpop.f32.mrf.mxu0
      %v2041 = vadd.f32 %v1441, %v2040
      %v2042 = vpop.f32.mrf.mxu0
      %v2043 = vpop.f32.mrf.mxu0
      %2044 = vdwg.mxu0
      %2045 = vmatprep.subr.bf16.mxu0 %v1827
      %2046 = vmatpush1.bf16.msra.mxu0 %v1826
      %2047 = vmatprep.subr.bf16.mxu0 %v1825
      %2048 = vmatpush1.bf16.msra.mxu0 %v1824
      %2049 = vmatprep.subr.bf16.mxu0 %v1823
      %2050 = vmatpush1.bf16.msra.mxu0 %v1822
      %2051 = vmatprep.subr.bf16.mxu0 %v1821
      %2052 = vmatpush1.bf16.msra.mxu0 %v1820
      %2053 = vmatprep.subr.bf16.mxu0 %v1819
      %2054 = vmatpush1.bf16.msra.mxu0 %v1818
      %2055 = vmatprep.subr.bf16.mxu0 %v1817
      %2056 = vmatpush1.bf16.msra.mxu0 %v1816
      %2057 = vmatprep.subr.bf16.mxu0 %v1815
      %2058 = vmatpush1.bf16.msra.mxu0 %v1814
      %2059 = vmatprep.subr.bf16.mxu0 %v1813
      %2060 = vmatpush1.bf16.msra.mxu0 %v1812
      %2061 = vmatprep.subr.bf16.mxu0 %v1843
      %2062 = vmatpush2.bf16.msra.mxu0 %v1842
      %2063 = vmatprep.subr.bf16.mxu0 %v1841
      %2064 = vmatpush2.bf16.msra.mxu0 %v1840
      %2065 = vmatprep.subr.bf16.mxu0 %v1839
      %2066 = vmatpush2.bf16.msra.mxu0 %v1838
      %2067 = vmatprep.subr.bf16.mxu0 %v1837
      %2068 = vmatpush2.bf16.msra.mxu0 %v1836
      %2069 = vmatprep.subr.bf16.mxu0 %v1835
      %2070 = vmatpush2.bf16.msra.mxu0 %v1834
      %2071 = vmatprep.subr.bf16.mxu0 %v1833
      %2072 = vmatpush2.bf16.msra.mxu0 %v1832
      %2073 = vmatprep.subr.bf16.mxu0 %v1831
      %2074 = vmatpush2.bf16.msra.mxu0 %v1830
      %2075 = vmatprep.subr.bf16.mxu0 %v1829
      %2076 = vmatpush2.bf16.msra.mxu0 %v1828
      %2077 = vmatprep.mubr.bf16.mxu0 %v1316
      %2078 = vmatmul.mubr.bf16.gmra.mxu0 %v1315
      %v2079 = vpop.f32.mrf.mxu0
      %v2080 = vadd.f32 %v2039, %v2079
      %v2081 = vpop.f32.mrf.mxu0
      %v2082 = vadd.f32 %v2041, %v2081
      %v2083 = vpop.f32.mrf.mxu0
      %v2084 = vpop.f32.mrf.mxu0
      %2085 = vdwg.mxu0
      %2086 = vmatprep.subr.bf16.mxu0 %v1859
      %2087 = vmatpush1.bf16.msra.mxu0 %v1858
      %2088 = vmatprep.subr.bf16.mxu0 %v1857
      %2089 = vmatpush1.bf16.msra.mxu0 %v1856
      %2090 = vmatprep.subr.bf16.mxu0 %v1855
      %2091 = vmatpush1.bf16.msra.mxu0 %v1854
      %2092 = vmatprep.subr.bf16.mxu0 %v1853
      %2093 = vmatpush1.bf16.msra.mxu0 %v1852
      %2094 = vmatprep.subr.bf16.mxu0 %v1851
      %2095 = vmatpush1.bf16.msra.mxu0 %v1850
      %2096 = vmatprep.subr.bf16.mxu0 %v1849
      %2097 = vmatpush1.bf16.msra.mxu0 %v1848
      %2098 = vmatprep.subr.bf16.mxu0 %v1847
      %2099 = vmatpush1.bf16.msra.mxu0 %v1846
      %2100 = vmatprep.subr.bf16.mxu0 %v1845
      %2101 = vmatpush1.bf16.msra.mxu0 %v1844
      %2102 = vmatprep.subr.bf16.mxu0 %v1875
      %2103 = vmatpush2.bf16.msra.mxu0 %v1874
      %2104 = vmatprep.subr.bf16.mxu0 %v1873
      %2105 = vmatpush2.bf16.msra.mxu0 %v1872
      %2106 = vmatprep.subr.bf16.mxu0 %v1871
      %2107 = vmatpush2.bf16.msra.mxu0 %v1870
      %2108 = vmatprep.subr.bf16.mxu0 %v1869
      %2109 = vmatpush2.bf16.msra.mxu0 %v1868
      %2110 = vmatprep.subr.bf16.mxu0 %v1867
      %2111 = vmatpush2.bf16.msra.mxu0 %v1866
      %2112 = vmatprep.subr.bf16.mxu0 %v1865
      %2113 = vmatpush2.bf16.msra.mxu0 %v1864
      %2114 = vmatprep.subr.bf16.mxu0 %v1863
      %2115 = vmatpush2.bf16.msra.mxu0 %v1862
      %2116 = vmatprep.subr.bf16.mxu0 %v1861
      %2117 = vmatpush2.bf16.msra.mxu0 %v1860
      %2118 = vmatprep.mubr.bf16.mxu0 %v1318
      %2119 = vmatmul.mubr.bf16.gmra.mxu0 %v1317
      %v2120 = vpop.f32.mrf.mxu0
      %v2121 = vadd.f32 %v2080, %v2120
      %v2122 = vpop.f32.mrf.mxu0
      %v2123 = vadd.f32 %v2082, %v2122
      %v2124 = vpop.f32.mrf.mxu0
      %v2125 = vpop.f32.mrf.mxu0
      %2126 = vdwg.mxu0
      %2127 = vmatprep.subr.bf16.mxu0 %v1891
      %2128 = vmatpush1.bf16.msra.mxu0 %v1890
      %2129 = vmatprep.subr.bf16.mxu0 %v1889
      %2130 = vmatpush1.bf16.msra.mxu0 %v1888
      %2131 = vmatprep.subr.bf16.mxu0 %v1887
      %2132 = vmatpush1.bf16.msra.mxu0 %v1886
      %2133 = vmatprep.subr.bf16.mxu0 %v1885
      %2134 = vmatpush1.bf16.msra.mxu0 %v1884
      %2135 = vmatprep.subr.bf16.mxu0 %v1883
      %2136 = vmatpush1.bf16.msra.mxu0 %v1882
      %2137 = vmatprep.subr.bf16.mxu0 %v1881
      %2138 = vmatpush1.bf16.msra.mxu0 %v1880
      %2139 = vmatprep.subr.bf16.mxu0 %v1879
      %2140 = vmatpush1.bf16.msra.mxu0 %v1878
      %2141 = vmatprep.subr.bf16.mxu0 %v1877
      %2142 = vmatpush1.bf16.msra.mxu0 %v1876
      %2143 = vmatprep.subr.bf16.mxu0 0
      %2144 = vmatpush2.bf16.msra.mxu0 0
      %2145 = vmatprep.subr.bf16.mxu0 0
      %2146 = vmatpush2.bf16.msra.mxu0 0
      %2147 = vmatprep.subr.bf16.mxu0 0
      %2148 = vmatpush2.bf16.msra.mxu0 0
      %2149 = vmatprep.subr.bf16.mxu0 0
      %2150 = vmatpush2.bf16.msra.mxu0 0
      %2151 = vmatprep.subr.bf16.mxu0 0
      %2152 = vmatpush2.bf16.msra.mxu0 0
      %2153 = vmatprep.subr.bf16.mxu0 0
      %2154 = vmatpush2.bf16.msra.mxu0 0
      %2155 = vmatprep.subr.bf16.mxu0 0
      %2156 = vmatpush2.bf16.msra.mxu0 0
      %2157 = vmatprep.subr.bf16.mxu0 0
      %2158 = vmatpush2.bf16.msra.mxu0 0
      %2159 = vmatprep.mubr.bf16.mxu0 0
      %2160 = vmatmul.mubr.bf16.gmra.mxu0 %v1319
      %v2161 = vpop.f32.mrf.mxu0
      %v2162 = vadd.f32 %v2121, %v2161
      %v2163 = vpop.f32.mrf.mxu0
      %v2164 = vadd.f32 %v2123, %v2163
      %v2165 = vpop.f32.mrf.mxu0
      %v2166 = vpop.f32.mrf.mxu0
      %2167 = vdwg.mxu0
      %v2168 = vmax.f32 %v2162, 0.0
      %v2169 = vmax.f32 %v2164, 0.0
      %v2170 = vpack.c.bf16 %v2168, %v2168
      %v2171 = vpack.c.bf16 %v2169, %v2169
      %v2172 = vld [vmem:[%s9] sm:$0xf]
      %v2173 = vld [vmem:[%s9 + $0x4] sm:$0xf]
      %v2174 = vld [vmem:[%s9 + $0x8] sm:$0xf]
      %v2175 = vld [vmem:[%s9 + $0xc] sm:$0xf]
      %v2176 = vld [vmem:[%s9 + $0x10] sm:$0xf]
      %v2177 = vld [vmem:[%s9 + $0x14] sm:$0xf]
      %v2178 = vld [vmem:[%s9 + $0x18] sm:$0xf]
      %v2179 = vld [vmem:[%s9 + $0x1c] sm:$0xf]
      %v2180 = vld [vmem:[%s9 + $0x20] sm:$0xf]
      %v2181 = vld [vmem:[%s9 + $0x24] sm:$0xf]
      %v2182 = vld [vmem:[%s9 + $0x28] sm:$0xf]
      %v2183 = vld [vmem:[%s9 + $0x2c] sm:$0xf]
      %v2184 = vld [vmem:[%s9 + $0x30] sm:$0xf]
      %v2185 = vld [vmem:[%s9 + $0x34] sm:$0xf]
      %v2186 = vld [vmem:[%s9 + $0x38] sm:$0xf]
      %v2187 = vld [vmem:[%s9 + $0x3c] sm:$0xf]
      %v2188 = vld [vmem:[%s9 + $0x40] sm:$0xf]
      %v2189 = vld [vmem:[%s9 + $0x44] sm:$0xf]
      %v2190 = vld [vmem:[%s9 + $0x48] sm:$0xf]
      %v2191 = vld [vmem:[%s9 + $0x4c] sm:$0xf]
      %v2192 = vld [vmem:[%s9 + $0x50] sm:$0xf]
      %v2193 = vld [vmem:[%s9 + $0x54] sm:$0xf]
      %v2194 = vld [vmem:[%s9 + $0x58] sm:$0xf]
      %v2195 = vld [vmem:[%s9 + $0x5c] sm:$0xf]
      %v2196 = vld [vmem:[%s9 + $0x60] sm:$0xf]
      %v2197 = vld [vmem:[%s9 + $0x64] sm:$0xf]
      %v2198 = vld [vmem:[%s9 + $0x68] sm:$0xf]
      %v2199 = vld [vmem:[%s9 + $0x6c] sm:$0xf]
      %v2200 = vld [vmem:[%s9 + $0x70] sm:$0xf]
      %v2201 = vld [vmem:[%s9 + $0x74] sm:$0xf]
      %v2202 = vld [vmem:[%s9 + $0x78] sm:$0xf]
      %v2203 = vld [vmem:[%s9 + $0x7c] sm:$0xf]
      %v2204 = vld [vmem:[%s10] sm:$0x1]
      %v2206 = vlaneseq
      %v2207 = vshrl.u32 %v2206, 7
      %v2208 = vsub.s32 0, %v2207
      %v2209 = vrot.slane %v2204, %v2208
      %v2243 = vunpack.c.l.b16 %v2172
      %v2244 = vunpack.c.l.b16 %v2173
      %v2245 = vunpack.c.l.b16 %v2174
      %v2246 = vunpack.c.l.b16 %v2175
      %v2247 = vunpack.c.l.b16 %v2176
      %v2248 = vunpack.c.l.b16 %v2177
      %v2249 = vunpack.c.l.b16 %v2178
      %v2250 = vunpack.c.l.b16 %v2179
      %v2251 = vunpack.c.l.b16 %v2180
      %v2252 = vunpack.c.l.b16 %v2181
      %v2253 = vunpack.c.l.b16 %v2182
      %v2254 = vunpack.c.l.b16 %v2183
      %v2255 = vunpack.c.l.b16 %v2184
      %v2256 = vunpack.c.l.b16 %v2185
      %v2257 = vunpack.c.l.b16 %v2186
      %v2258 = vunpack.c.l.b16 %v2187
      %v2259 = vunpack.c.l.b16 %v2188
      %v2260 = vunpack.c.l.b16 %v2189
      %v2261 = vunpack.c.l.b16 %v2190
      %v2262 = vunpack.c.l.b16 %v2191
      %v2263 = vunpack.c.l.b16 %v2192
      %v2264 = vunpack.c.l.b16 %v2193
      %v2265 = vunpack.c.l.b16 %v2194
      %v2266 = vunpack.c.l.b16 %v2195
      %v2267 = vunpack.c.l.b16 %v2196
      %v2268 = vunpack.c.l.b16 %v2197
      %v2269 = vunpack.c.l.b16 %v2198
      %v2270 = vunpack.c.l.b16 %v2199
      %v2271 = vunpack.c.l.b16 %v2200
      %v2272 = vunpack.c.l.b16 %v2201
      %v2273 = vunpack.c.l.b16 %v2202
      %v2274 = vunpack.c.l.b16 %v2203
      %v2275 = vpack.c.b16 %v2244, %v2243
      %v2276 = vpack.c.b16 %v2246, %v2245
      %v2277 = vpack.c.b16 %v2248, %v2247
      %v2278 = vpack.c.b16 %v2250, %v2249
      %v2279 = vpack.c.b16 %v2252, %v2251
      %v2280 = vpack.c.b16 %v2254, %v2253
      %v2281 = vpack.c.b16 %v2256, %v2255
      %v2282 = vpack.c.b16 %v2258, %v2257
      %v2283 = vpack.c.b16 %v2260, %v2259
      %v2284 = vpack.c.b16 %v2262, %v2261
      %v2285 = vpack.c.b16 %v2264, %v2263
      %v2286 = vpack.c.b16 %v2266, %v2265
      %v2287 = vpack.c.b16 %v2268, %v2267
      %v2288 = vpack.c.b16 %v2270, %v2269
      %v2289 = vpack.c.b16 %v2272, %v2271
      %v2290 = vpack.c.b16 %v2274, %v2273
      %2307 = vmatprep.subr.bf16.mxu0 0
      %2308 = vmatpush1.bf16.msra.mxu0 %v2282
      %2309 = vmatprep.subr.bf16.mxu0 0
      %2310 = vmatpush1.bf16.msra.mxu0 %v2281
      %2311 = vmatprep.subr.bf16.mxu0 0
      %2312 = vmatpush1.bf16.msra.mxu0 %v2280
      %2313 = vmatprep.subr.bf16.mxu0 0
      %2314 = vmatpush1.bf16.msra.mxu0 %v2279
      %2315 = vmatprep.subr.bf16.mxu0 0
      %2316 = vmatpush1.bf16.msra.mxu0 %v2278
      %2317 = vmatprep.subr.bf16.mxu0 0
      %2318 = vmatpush1.bf16.msra.mxu0 %v2277
      %2319 = vmatprep.subr.bf16.mxu0 0
      %2320 = vmatpush1.bf16.msra.mxu0 %v2276
      %2321 = vmatprep.subr.bf16.mxu0 0
      %2322 = vmatpush1.bf16.msra.mxu0 %v2275
      %2323 = vmatprep.subr.bf16.mxu0 0
      %2324 = vmatpush2.bf16.msra.mxu0 %v2290
      %2325 = vmatprep.subr.bf16.mxu0 0
      %2326 = vmatpush2.bf16.msra.mxu0 %v2289
      %2327 = vmatprep.subr.bf16.mxu0 0
      %2328 = vmatpush2.bf16.msra.mxu0 %v2288
      %2329 = vmatprep.subr.bf16.mxu0 0
      %2330 = vmatpush2.bf16.msra.mxu0 %v2287
      %2331 = vmatprep.subr.bf16.mxu0 0
      %2332 = vmatpush2.bf16.msra.mxu0 %v2286
      %2333 = vmatprep.subr.bf16.mxu0 0
      %2334 = vmatpush2.bf16.msra.mxu0 %v2285
      %2335 = vmatprep.subr.bf16.mxu0 0
      %2336 = vmatpush2.bf16.msra.mxu0 %v2284
      %2337 = vmatprep.subr.bf16.mxu0 0
      %2338 = vmatpush2.bf16.msra.mxu0 %v2283
      %2339 = vmatprep.mubr.bf16.mxu0 %v2171
      %2340 = vmatmul.mubr.bf16.gmra.mxu0 %v2170
      %v2341 = vpop.f32.mrf.mxu0
      %v2342 = vadd.f32 %v2209, %v2341
      %v2343 = vpop.f32.mrf.mxu0
      %v2344 = vpop.f32.mrf.mxu0
      %v2345 = vpop.f32.mrf.mxu0
      %2346 = vdwg.mxu0
      %vm2347 = vcmask 31744
      %2348 = vst.msk [vmem:[%s384] sm:$0xff] %vm2347, %v2342
      %p2349 = scmp.lt.s32.totalorder %s22, 1
      %s2350 = scalar_select %p2349, %s22, 1
      %s2351 = smul.addr %s2350, 8
      %s2352 = scalar_lea.vmem %s11, %s2351
      // Predicated region
      $region65: #{cnn_forward.1} parent=63 // pred_check
        %p2353 = pneg %p276
      $region66: #{cnn_forward.1} parent=63 // pred_check_branch
        %2355 = sbr.rel (%p2353) target = $region68
      $region67: #{cnn_forward.1} parent=63 // pred_region
        _
      $region68: #{cnn_forward.1} parent=63 // pred_fallthru
        _
    $region64: #{cnn_forward.1} parent=5 // pred_fallthru
      _
    %p2356 = scmp.le.s32.totalorder 2, %s17
    // Predicated region
    $region69: #{cnn_forward.1} parent=5 // pred_check
      %p2357 = pneg %p2356
    $region70: #{cnn_forward.1} parent=5 // pred_check_branch
      %2359 = sbr.rel (%p2357) target = $region72
    $region71: #{cnn_forward.1} parent=5 // pred_region
      %s2360 = ssub.s32 %s17, 2
      // Predicated region
      $region73: #{cnn_forward.1} parent=71 // pred_check
        %p2361 = pneg %p282
      $region74: #{cnn_forward.1} parent=71 // pred_check_branch
        %2363 = sbr.rel (%p2361) target = $region76
      $region75: #{cnn_forward.1} parent=71 // pred_region
        %p2364 = scmp.lt.s32.totalorder %s23, 1
        %s2365 = scalar_select %p2364, %s23, 1
        %s2366 = smul.addr %s2365, 8
        %s2367 = scalar_lea.vmem %s11, %s2366
      $region76: #{cnn_forward.1} parent=71 // pred_fallthru
        _
    $region72: #{cnn_forward.1} parent=5 // pred_fallthru
      _
  $region6: #{cnn_forward.1} parent=0 // loop_footer
    %s21 = sadd.s32 1, %s17
  $region7: #{cnn_forward.1} parent=0 // loop_footer_branch
    %16 = sbr.rel target = $region3
  $region8: #{cnn_forward.1} parent=0 // loop_exit
    _

</llo_original>
